<compile_context>
chip_gen: v5e
topology: v5e:2x2
jax: 0.10.0
libtpu: 0.0.40
codegen_flags: <defaults>
</compile_context>

<pallas_src>
import functools

import jax
import jax.numpy as jnp
from jax.experimental import pallas as pl
from jax.experimental.pallas import tpu as pltpu


# ----------------------------------------------------------------------------
# Single fused kernel: z0 fold + dual-field Euler CDE integration + all heads
# ----------------------------------------------------------------------------
def _neural_de_fused_kernel(
        x_ref,                                            # [T, Bt, C] time-major, f32
        wi_ref, bi_ref,                                   # [C, 2H] f32, [1, 2H] f32 (bias pre-scaled by T)
        w0_ref, b0_ref, w1_ref, b1_ref, w2_ref, b2_ref,   # block-diag fused MLP (W* bf16, b* f32)
        w3_ref, b3_ref, w4_ref, b4_ref,
        s_ref, r_ref,                                     # [C, 2CH] f32, [2CH, 2H] bf16 selectors
        wh_ref, bh_ref,                                   # [2H, P] bf16, [1, P] f32 fused heads
        heads_ref,                                        # out: [T, Bt, P] f32, lane-dense
        *, n_steps, batch):
    T = n_steps + 1
    f32 = jnp.float32
    bf16 = jnp.bfloat16

    x = x_ref[...]                                        # [T, Bt, C] (loaded once)

    # --- z0 (both fields): (sum_t X_t) @ [Wi|Wi] + T*[bi|bi]  (affine fold, f32) ---
    z = (jnp.dot(jnp.sum(x, axis=0), wi_ref[...], preferred_element_type=f32)
         + bi_ref[...])                                   # [Bt, 2H]

    # --- hoisted control increments + per-channel broadcast (one matmul) -----
    # dxb[i, b, h*C+c] = dx[i, b, c]; S is 0/1 and dx stays f32 -> exact replication.
    dx = (x[1:] - x[:-1]).reshape(n_steps * batch, -1)    # [(T-1)*Bt, C]
    dxb = jnp.dot(dx, s_ref[...], preferred_element_type=f32)          # [(T-1)*Bt, 2CH]
    dxb = dxb.reshape(n_steps, batch, dxb.shape[-1])

    # --- fused f/g Euler integration: z_{t+1} = z_t + f(z_t) @ dX_t ----------
    # Fully unrolled (static small trip count).  Weight refs are indexed at the
    # point of use (no pinned vregs); dot operands are bf16, accumulation f32,
    # elementwise math f32.
    zs = [z]
    for i in range(n_steps):
        h = jnp.maximum(jnp.dot(z.astype(bf16), w0_ref[...],
                                preferred_element_type=f32) + b0_ref[...], 0.0)
        h = jnp.maximum(jnp.dot(h.astype(bf16), w1_ref[...],
                                preferred_element_type=f32) + b1_ref[...], 0.0)
        h = jnp.maximum(jnp.dot(h.astype(bf16), w2_ref[...],
                                preferred_element_type=f32) + b2_ref[...], 0.0)
        h = jnp.maximum(jnp.dot(h.astype(bf16), w3_ref[...],
                                preferred_element_type=f32) + b3_ref[...], 0.0)
        f = jnp.dot(h.astype(bf16), w4_ref[...],
                    preferred_element_type=f32) + b4_ref[...]           # [Bt, 2CH]
        # torch view(B, H, C) @ dX:  dz[b, h] = sum_c f[b, h*C + c] * dx[b, c]
        # on the MXU: dz = (f * dxb) @ R   (R is 0/1)
        z = z + jnp.dot((f * dxb[i]).astype(bf16), r_ref[...],
                        preferred_element_type=f32)                     # [Bt, 2H]
        zs.append(z)

    # --- fused heads: one matmul over the register-resident trajectory -------
    traj = jnp.concatenate(zs, axis=0)                    # [T*Bt, 2H], rows = (t, b)
    heads = (jnp.dot(traj.astype(bf16), wh_ref[...], preferred_element_type=f32)
             + bh_ref[...])                               # [T*Bt, P]
    heads_ref[...] = heads.reshape(T, batch, heads.shape[-1])


# ----------------------------------------------------------------------------
# Weight packing (block-diagonal f/g fusion, selector matrices, fused heads)
# ----------------------------------------------------------------------------
def _block_diag(a, b):
    ra, ca = a.shape
    rb, cb = b.shape
    top = jnp.concatenate([a, jnp.zeros((ra, cb), a.dtype)], axis=1)
    bot = jnp.concatenate([jnp.zeros((rb, ca), b.dtype), b], axis=1)
    return jnp.concatenate([top, bot], axis=0)


def _pack_inputs(params, T, C, H, head_pad):
    bf16 = jnp.bfloat16
    Wi, bi = params['initial']                            # torch layout [H, C], [H]
    wi_cat = jnp.concatenate([Wi.T, Wi.T], axis=1).astype(jnp.float32)      # [C, 2H]
    # Linear applied per-timestep then summed over T  ->  bias contributes T times.
    bi_cat = (float(T) * jnp.concatenate([bi, bi]))[None, :].astype(jnp.float32)

    fused_layers = []
    for (Wf, bf), (Wg, bg) in zip(params['func_f'], params['func_g']):
        fused_layers.append(_block_diag(Wf.T, Wg.T).astype(bf16))   # bf16 dot operand
        fused_layers.append(jnp.concatenate([bf, bg])[None, :].astype(jnp.float32))

    # Selector/reduction matrices for dz = (f * (dx @ S)) @ R with the torch
    # view(B, H, C) flat ordering j = h*C + c (in each of the two field halves).
    CH = C * H
    j = jnp.arange(2 * CH)
    chan = j % C                                          # channel of flat index
    hidden = (j % CH) // C + H * (j // CH)                # fused hidden index
    S = (chan[None, :] == jnp.arange(C)[:, None]).astype(jnp.float32)    # [C, 2CH], f32 (exact)
    R = (hidden[:, None] == jnp.arange(2 * H)[None, :]).astype(bf16)     # [2CH, 2H]

    # Fused head weights: columns [rec(C) | forecast(C) | readout(O) | readout2(O) | 0-pad].
    Wro, bro = params['readout']
    Wro2, bro2 = params['readout2']
    Wfc, bfc = params['forecast']
    Wrec, brec = params['reconstruct']
    O = Wro.shape[0]
    Wh = jnp.zeros((2 * H, head_pad), jnp.float32)
    bh = jnp.zeros((head_pad,), jnp.float32)
    Wh = Wh.at[:H, 0:C].set(Wrec.T)                       # reconstruct(z_f)
    bh = bh.at[0:C].set(brec)
    Wh = Wh.at[H:, C:2 * C].set(Wfc.T)                    # forecast(z_g)
    bh = bh.at[C:2 * C].set(bfc)
    Wh = Wh.at[:H, 2 * C:2 * C + O].set(Wro.T)            # readout(z_f)
    bh = bh.at[2 * C:2 * C + O].set(bro)
    Wh = Wh.at[H:, 2 * C + O:2 * C + 2 * O].set(Wro2.T)   # readout2(z_g)
    bh = bh.at[2 * C + O:2 * C + 2 * O].set(bro2)

    return [wi_cat, bi_cat, *fused_layers, S, R,
            Wh.astype(bf16), bh[None, :].astype(jnp.float32)]


# ----------------------------------------------------------------------------
# NeuralDE forward (eval mode, 'ncde')
# ----------------------------------------------------------------------------
def neural_de_forward(coeffs, params, forecast_window):
    B, T, C = coeffs.shape
    H = params['initial'][0].shape[0]
    O = params['readout'][0].shape[0]
    head_pad = max(128, ((2 * C + 2 * O + 127) // 128) * 128)

    x_tm = jnp.transpose(coeffs, (1, 0, 2)).astype(jnp.float32)     # [T, B, C] time-major
    packed = _pack_inputs(params, T, C, H, head_pad)
    n_steps = T - 1

    # Batch grid: weights get constant index_maps (DMA'd once, VMEM-resident);
    # the batch axis is "parallel" so it shards across v7x's 2 TensorCores.
    B_TILE = min(B, 128)
    assert B % B_TILE == 0  # TODO(synk): pad batch for non-multiple-of-tile sizes
    grid = (B // B_TILE,)

    x_spec = pl.BlockSpec((T, B_TILE, C), lambda b: (0, b, 0))

    def _resident_spec(a):
        nd = a.ndim
        return pl.BlockSpec(a.shape, lambda b: (0,) * nd)

    in_specs = [x_spec] + [_resident_spec(a) for a in packed]
    out_spec = pl.BlockSpec((T, B_TILE, head_pad), lambda b: (0, b, 0))

    kern = functools.partial(_neural_de_fused_kernel, n_steps=n_steps, batch=B_TILE)
    heads_out = pl.pallas_call(
        kern,
        out_shape=jax.ShapeDtypeStruct((T, B, head_pad), jnp.float32),
        grid=grid,
        in_specs=in_specs,
        out_specs=out_spec,
        compiler_params=pltpu.CompilerParams(
            dimension_semantics=("parallel",)),
    )(x_tm, *packed)

    pred_reconstruct = jnp.transpose(heads_out[:, :, 0:C], (1, 0, 2))                     # [B, T, C]
    pred_next_forecast = jnp.transpose(
        heads_out[T - forecast_window:, :, C:2 * C], (1, 0, 2))                           # [B, fw, C]
    pred_y = heads_out[T - 1, :, 2 * C:2 * C + O]                                         # [B, O]
    pred_next_y = heads_out[T - 1, :, 2 * C + O:2 * C + 2 * O]                            # [B, O]
    if O == 1:                                            # .squeeze(-1) semantics
        pred_y = pred_y[:, 0]
        pred_next_y = pred_next_y[:, 0]
    return pred_y, pred_reconstruct, pred_next_y, pred_next_forecast


# ----------------------------------------------------------------------------
# Parameter construction (deterministic, PyTorch-Linear-style init)
# ----------------------------------------------------------------------------
def _linear_params(key, in_dim, out_dim):
    kw, kb = jax.random.split(key)
    bound = 1.0 / (in_dim ** 0.5)
    W = jax.random.uniform(kw, (out_dim, in_dim), jnp.float32, -bound, bound)  # [out, in]
    b = jax.random.uniform(kb, (out_dim,), jnp.float32, -bound, bound)
    return W, b


def init_params(key, C, H, HHf, HHg, HHc, O):
    keys = iter(jax.random.split(key, 20))
    lin = lambda i, o: _linear_params(next(keys), i, o)
    return {
        'initial': lin(C, H),
        'func_f': (lin(H, HHf), lin(HHf, HHf), lin(HHf, HHf), lin(HHf, HHf), lin(HHf, C * H)),
        'func_g': (lin(H, HHg), lin(HHg, HHg), lin(HHg, HHg), lin(HHg, HHg), lin(HHg, C * H)),
        'func_c': (lin(H, HHc), lin(HHc, C * H)),   # mirrors __init__; unused (see TODO)
        'readout': lin(H, O),
        'readout2': lin(H, O),
        'forecast': lin(H, C),
        'reconstruct': lin(H, C),
    }


# ----------------------------------------------------------------------------
# Pure-jnp reference of the torch module semantics (separate f/g fields,
# per-layer Linear, torch .view(B, H, C) ordering).  With bf16_dots=True it
# applies the same bf16 matmul-operand quantisation points as the kernel
# (f32 accumulation everywhere), so the comparison tolerance can be tight.
# ----------------------------------------------------------------------------
def _ref_forward(coeffs, params, fw, bf16_dots=False):
    B, T, C = coeffs.shape
    Wi, bi = params['initial']
    H = Wi.shape[0]
    bf16 = jnp.bfloat16

    def lin(x, W, b):
        if bf16_dots:
            return jnp.dot(x.astype(bf16), W.T.astype(bf16),
                           preferred_element_type=jnp.float32) + b
        return x @ W.T + b

    z0 = jnp.sum(coeffs @ Wi.T + bi, axis=1)              # initial(X0).sum(dim=1), f32
    dx = coeffs[:, 1:, :] - coeffs[:, :-1, :]

    def mlp(layers, z):
        for W, b in layers[:-1]:
            z = jax.nn.relu(lin(z, W, b))
        W, b = layers[-1]
        return lin(z, W, b).reshape(B, H, C)              # torch .view(B, H, C)

    def integrate(layers):
        zs, z = [z0], z0
        for t in range(T - 1):
            prod = mlp(layers, z) * dx[:, t, :][:, None, :]
            if bf16_dots:                                 # kernel quantises the product
                prod = prod.astype(bf16).astype(jnp.float32)
            z = z + jnp.sum(prod, axis=-1)
            zs.append(z)
        return jnp.stack(zs, axis=1)                      # [B, T, H]

    z_T = integrate(params['func_f'])
    h_T = integrate(params['func_g'])
    Wro, bro = params['readout']
    Wro2, bro2 = params['readout2']
    Wfc, bfc = params['forecast']
    Wrec, brec = params['reconstruct']
    pred_y = lin(z_T[:, -1, :], Wro, bro)
    pred_rec = lin(z_T, Wrec, brec)
    fh = h_T[:, T - fw:, :]
    pred_fc = lin(fh, Wfc, bfc)
    pred_ny = lin(fh, Wro2, bro2)[:, -1, :]
    if Wro.shape[0] == 1:
        pred_y = pred_y[:, 0]
        pred_ny = pred_ny[:, 0]
    return pred_y, pred_rec, pred_ny, pred_fc


if __name__ == "__main__":
    B, T, C_in, H = 2, 8, 4, 32
    HH = 32           # hidden_hiddens = (32, 32, 32)
    O = 1             # output_channels
    FW = 3            # forecast_window

    key = jax.random.PRNGKey(0)
    kcoef, kparam = jax.random.split(key)
    coeffs = jax.random.normal(kcoef, (B, T, C_in), jnp.float32)
    params = init_params(kparam, C_in, H, HH, HH, HH, O)

    fwd = jax.jit(neural_de_forward, static_argnums=(2,))
    outs = jax.block_until_ready(fwd(coeffs, params, FW))
    pred_y, pred_reconstruct, pred_next_y, pred_next_forecast = outs

    assert pred_y.shape == (B,)
    assert pred_reconstruct.shape == (B, T, C_in)
    assert pred_next_y.shape == (B,)
    assert pred_next_forecast.shape == (B, FW, C_in)
    for o in outs:
        assert bool(jnp.all(jnp.isfinite(o)))

    # Tight unit test: jnp reference of the torch view/matmul semantics with the
    # same bf16 dot-operand quantisation points as the kernel (f32 accumulate),
    # so only the fusion / selector / head-slab logic is under test.
    ref_fn = jax.jit(functools.partial(_ref_forward, bf16_dots=True),
                     static_argnums=(2,))
    refs = jax.block_until_ready(ref_fn(coeffs, params, FW))
    for got, ref in zip(outs, refs):
        assert got.shape == ref.shape
        assert bool(jnp.allclose(got, ref, rtol=1e-3, atol=1e-3)), (got, ref)

    print("KERNEL_OK")
</pallas_src>

<mosaic_0001>
module attributes {stable_mosaic.version = 11 : i64} {
  func.func @_neural_de_fused_kernel(%arg0: i32, %arg1: memref<8x2x4xf32, #tpu.memory_space<vmem>>, %arg2: memref<4x64xf32, #tpu.memory_space<vmem>>, %arg3: memref<1x64xf32, #tpu.memory_space<vmem>>, %arg4: memref<64x64xbf16, #tpu.memory_space<vmem>>, %arg5: memref<1x64xf32, #tpu.memory_space<vmem>>, %arg6: memref<64x64xbf16, #tpu.memory_space<vmem>>, %arg7: memref<1x64xf32, #tpu.memory_space<vmem>>, %arg8: memref<64x64xbf16, #tpu.memory_space<vmem>>, %arg9: memref<1x64xf32, #tpu.memory_space<vmem>>, %arg10: memref<64x64xbf16, #tpu.memory_space<vmem>>, %arg11: memref<1x64xf32, #tpu.memory_space<vmem>>, %arg12: memref<64x256xbf16, #tpu.memory_space<vmem>>, %arg13: memref<1x256xf32, #tpu.memory_space<vmem>>, %arg14: memref<4x256xf32, #tpu.memory_space<vmem>>, %arg15: memref<256x64xbf16, #tpu.memory_space<vmem>>, %arg16: memref<64x128xbf16, #tpu.memory_space<vmem>>, %arg17: memref<1x128xf32, #tpu.memory_space<vmem>>, %arg18: memref<8x2x128xf32, #tpu.memory_space<vmem>>) attributes {dimension_semantics = [#tpu.dimension_semantics<parallel>], iteration_bounds = array<i64: 1>, scalar_prefetch = 0 : i64, scratch_operands = 0 : i64, tpu.core_type = #tpu.core_type<tc>, window_params = [{transform_indices = @transform_0, window_bounds = array<i64: 8, 2, 4>}, {pipeline_mode = #tpu.pipeline_mode<synchronous>, transform_indices = @transform_1, window_bounds = array<i64: 4, 64>}, {pipeline_mode = #tpu.pipeline_mode<synchronous>, transform_indices = @transform_2, window_bounds = array<i64: 1, 64>}, {pipeline_mode = #tpu.pipeline_mode<synchronous>, transform_indices = @transform_3, window_bounds = array<i64: 64, 64>}, {pipeline_mode = #tpu.pipeline_mode<synchronous>, transform_indices = @transform_4, window_bounds = array<i64: 1, 64>}, {pipeline_mode = #tpu.pipeline_mode<synchronous>, transform_indices = @transform_5, window_bounds = array<i64: 64, 64>}, {pipeline_mode = #tpu.pipeline_mode<synchronous>, transform_indices = @transform_6, window_bounds = array<i64: 1, 64>}, {pipeline_mode = #tpu.pipeline_mode<synchronous>, transform_indices = @transform_7, window_bounds = array<i64: 64, 64>}, {pipeline_mode = #tpu.pipeline_mode<synchronous>, transform_indices = @transform_8, window_bounds = array<i64: 1, 64>}, {pipeline_mode = #tpu.pipeline_mode<synchronous>, transform_indices = @transform_9, window_bounds = array<i64: 64, 64>}, {pipeline_mode = #tpu.pipeline_mode<synchronous>, transform_indices = @transform_10, window_bounds = array<i64: 1, 64>}, {pipeline_mode = #tpu.pipeline_mode<synchronous>, transform_indices = @transform_11, window_bounds = array<i64: 64, 256>}, {pipeline_mode = #tpu.pipeline_mode<synchronous>, transform_indices = @transform_12, window_bounds = array<i64: 1, 256>}, {pipeline_mode = #tpu.pipeline_mode<synchronous>, transform_indices = @transform_13, window_bounds = array<i64: 4, 256>}, {pipeline_mode = #tpu.pipeline_mode<synchronous>, transform_indices = @transform_14, window_bounds = array<i64: 256, 64>}, {pipeline_mode = #tpu.pipeline_mode<synchronous>, transform_indices = @transform_15, window_bounds = array<i64: 64, 128>}, {pipeline_mode = #tpu.pipeline_mode<synchronous>, transform_indices = @transform_16, window_bounds = array<i64: 1, 128>}, {transform_indices = @transform_17, window_bounds = array<i64: 8, 2, 128>}]} {
    %c0 = arith.constant 0 : index
    %c0_0 = arith.constant 0 : index
    %c0_1 = arith.constant 0 : index
    %0 = vector.load %arg1[%c0, %c0_0, %c0_1] : memref<8x2x4xf32, #tpu.memory_space<vmem>>, vector<8x2x4xf32>
    %cst = arith.constant dense<0.000000e+00> : vector<2x4xf32>
    %1 = vector.multi_reduction <add>, %0, %cst [0] : vector<8x2x4xf32> to vector<2x4xf32>
    %c0_2 = arith.constant 0 : index
    %c0_3 = arith.constant 0 : index
    %2 = vector.load %arg2[%c0_2, %c0_3] : memref<4x64xf32, #tpu.memory_space<vmem>>, vector<4x64xf32>
    %cst_4 = arith.constant dense<0.000000e+00> : vector<2x64xf32>
    %3 = tpu.matmul %1, %2, %cst_4 {dimension_numbers = #tpu.dot_dimension_numbers<[1], [0], [0], [1], [0, 0, 1, 1], [], []>} : vector<2x4xf32>, vector<4x64xf32>, vector<2x64xf32> -> vector<2x64xf32>
    %c0_5 = arith.constant 0 : index
    %c0_6 = arith.constant 0 : index
    %4 = vector.load %arg3[%c0_5, %c0_6] : memref<1x64xf32, #tpu.memory_space<vmem>>, vector<1x64xf32>
    %5 = vector.broadcast %4 : vector<1x64xf32> to vector<2x64xf32>
    %6 = arith.addf %3, %5 : vector<2x64xf32>
    %7 = vector.extract_strided_slice %0 {offsets = [1, 0, 0], sizes = [7, 2, 4], strides = [1, 1, 1]} : vector<8x2x4xf32> to vector<7x2x4xf32>
    %8 = vector.extract_strided_slice %0 {offsets = [0, 0, 0], sizes = [7, 2, 4], strides = [1, 1, 1]} : vector<8x2x4xf32> to vector<7x2x4xf32>
    %9 = arith.subf %7, %8 : vector<7x2x4xf32>
    %10 = vector.shape_cast %9 : vector<7x2x4xf32> to vector<14x4xf32>
    %c0_7 = arith.constant 0 : index
    %c0_8 = arith.constant 0 : index
    %11 = vector.load %arg14[%c0_7, %c0_8] : memref<4x256xf32, #tpu.memory_space<vmem>>, vector<4x256xf32>
    %cst_9 = arith.constant dense<0.000000e+00> : vector<14x256xf32>
    %12 = tpu.matmul %10, %11, %cst_9 {dimension_numbers = #tpu.dot_dimension_numbers<[1], [0], [0], [1], [0, 0, 1, 1], [], []>} : vector<14x4xf32>, vector<4x256xf32>, vector<14x256xf32> -> vector<14x256xf32>
    %13 = vector.shape_cast %12 : vector<14x256xf32> to vector<7x2x256xf32>
    %14 = arith.truncf %6 : vector<2x64xf32> to vector<2x64xbf16>
    %c0_10 = arith.constant 0 : index
    %c0_11 = arith.constant 0 : index
    %15 = vector.load %arg4[%c0_10, %c0_11] : memref<64x64xbf16, #tpu.memory_space<vmem>>, vector<64x64xbf16>
    %cst_12 = arith.constant dense<0.000000e+00> : vector<2x64xf32>
    %16 = tpu.matmul %14, %15, %cst_12 {dimension_numbers = #tpu.dot_dimension_numbers<[1], [0], [0], [1], [0, 0, 1, 1], [], []>} : vector<2x64xbf16>, vector<64x64xbf16>, vector<2x64xf32> -> vector<2x64xf32>
    %c0_13 = arith.constant 0 : index
    %c0_14 = arith.constant 0 : index
    %17 = vector.load %arg5[%c0_13, %c0_14] : memref<1x64xf32, #tpu.memory_space<vmem>>, vector<1x64xf32>
    %18 = vector.broadcast %17 : vector<1x64xf32> to vector<2x64xf32>
    %19 = arith.addf %16, %18 : vector<2x64xf32>
    %cst_15 = arith.constant 0.000000e+00 : f32
    %20 = vector.broadcast %cst_15 : f32 to vector<2x64xf32>
    %21 = arith.maximumf %19, %20 : vector<2x64xf32>
    %22 = arith.truncf %21 : vector<2x64xf32> to vector<2x64xbf16>
    %c0_16 = arith.constant 0 : index
    %c0_17 = arith.constant 0 : index
    %23 = vector.load %arg6[%c0_16, %c0_17] : memref<64x64xbf16, #tpu.memory_space<vmem>>, vector<64x64xbf16>
    %cst_18 = arith.constant dense<0.000000e+00> : vector<2x64xf32>
    %24 = tpu.matmul %22, %23, %cst_18 {dimension_numbers = #tpu.dot_dimension_numbers<[1], [0], [0], [1], [0, 0, 1, 1], [], []>} : vector<2x64xbf16>, vector<64x64xbf16>, vector<2x64xf32> -> vector<2x64xf32>
    %c0_19 = arith.constant 0 : index
    %c0_20 = arith.constant 0 : index
    %25 = vector.load %arg7[%c0_19, %c0_20] : memref<1x64xf32, #tpu.memory_space<vmem>>, vector<1x64xf32>
    %26 = vector.broadcast %25 : vector<1x64xf32> to vector<2x64xf32>
    %27 = arith.addf %24, %26 : vector<2x64xf32>
    %cst_21 = arith.constant 0.000000e+00 : f32
    %28 = vector.broadcast %cst_21 : f32 to vector<2x64xf32>
    %29 = arith.maximumf %27, %28 : vector<2x64xf32>
    %30 = arith.truncf %29 : vector<2x64xf32> to vector<2x64xbf16>
    %c0_22 = arith.constant 0 : index
    %c0_23 = arith.constant 0 : index
    %31 = vector.load %arg8[%c0_22, %c0_23] : memref<64x64xbf16, #tpu.memory_space<vmem>>, vector<64x64xbf16>
    %cst_24 = arith.constant dense<0.000000e+00> : vector<2x64xf32>
    %32 = tpu.matmul %30, %31, %cst_24 {dimension_numbers = #tpu.dot_dimension_numbers<[1], [0], [0], [1], [0, 0, 1, 1], [], []>} : vector<2x64xbf16>, vector<64x64xbf16>, vector<2x64xf32> -> vector<2x64xf32>
    %c0_25 = arith.constant 0 : index
    %c0_26 = arith.constant 0 : index
    %33 = vector.load %arg9[%c0_25, %c0_26] : memref<1x64xf32, #tpu.memory_space<vmem>>, vector<1x64xf32>
    %34 = vector.broadcast %33 : vector<1x64xf32> to vector<2x64xf32>
    %35 = arith.addf %32, %34 : vector<2x64xf32>
    %cst_27 = arith.constant 0.000000e+00 : f32
    %36 = vector.broadcast %cst_27 : f32 to vector<2x64xf32>
    %37 = arith.maximumf %35, %36 : vector<2x64xf32>
    %38 = arith.truncf %37 : vector<2x64xf32> to vector<2x64xbf16>
    %c0_28 = arith.constant 0 : index
    %c0_29 = arith.constant 0 : index
    %39 = vector.load %arg10[%c0_28, %c0_29] : memref<64x64xbf16, #tpu.memory_space<vmem>>, vector<64x64xbf16>
    %cst_30 = arith.constant dense<0.000000e+00> : vector<2x64xf32>
    %40 = tpu.matmul %38, %39, %cst_30 {dimension_numbers = #tpu.dot_dimension_numbers<[1], [0], [0], [1], [0, 0, 1, 1], [], []>} : vector<2x64xbf16>, vector<64x64xbf16>, vector<2x64xf32> -> vector<2x64xf32>
    %c0_31 = arith.constant 0 : index
    %c0_32 = arith.constant 0 : index
    %41 = vector.load %arg11[%c0_31, %c0_32] : memref<1x64xf32, #tpu.memory_space<vmem>>, vector<1x64xf32>
    %42 = vector.broadcast %41 : vector<1x64xf32> to vector<2x64xf32>
    %43 = arith.addf %40, %42 : vector<2x64xf32>
    %cst_33 = arith.constant 0.000000e+00 : f32
    %44 = vector.broadcast %cst_33 : f32 to vector<2x64xf32>
    %45 = arith.maximumf %43, %44 : vector<2x64xf32>
    %46 = arith.truncf %45 : vector<2x64xf32> to vector<2x64xbf16>
    %c0_34 = arith.constant 0 : index
    %c0_35 = arith.constant 0 : index
    %47 = vector.load %arg12[%c0_34, %c0_35] : memref<64x256xbf16, #tpu.memory_space<vmem>>, vector<64x256xbf16>
    %cst_36 = arith.constant dense<0.000000e+00> : vector<2x256xf32>
    %48 = tpu.matmul %46, %47, %cst_36 {dimension_numbers = #tpu.dot_dimension_numbers<[1], [0], [0], [1], [0, 0, 1, 1], [], []>} : vector<2x64xbf16>, vector<64x256xbf16>, vector<2x256xf32> -> vector<2x256xf32>
    %c0_37 = arith.constant 0 : index
    %c0_38 = arith.constant 0 : index
    %49 = vector.load %arg13[%c0_37, %c0_38] : memref<1x256xf32, #tpu.memory_space<vmem>>, vector<1x256xf32>
    %50 = vector.broadcast %49 : vector<1x256xf32> to vector<2x256xf32>
    %51 = arith.addf %48, %50 : vector<2x256xf32>
    %52 = vector.extract_strided_slice %13 {offsets = [0, 0, 0], sizes = [1, 2, 256], strides = [1, 1, 1]} : vector<7x2x256xf32> to vector<1x2x256xf32>
    %53 = vector.shape_cast %52 : vector<1x2x256xf32> to vector<2x256xf32>
    %54 = arith.mulf %51, %53 : vector<2x256xf32>
    %55 = arith.truncf %54 : vector<2x256xf32> to vector<2x256xbf16>
    %c0_39 = arith.constant 0 : index
    %c0_40 = arith.constant 0 : index
    %56 = vector.load %arg15[%c0_39, %c0_40] : memref<256x64xbf16, #tpu.memory_space<vmem>>, vector<256x64xbf16>
    %cst_41 = arith.constant dense<0.000000e+00> : vector<2x64xf32>
    %57 = tpu.matmul %55, %56, %cst_41 {dimension_numbers = #tpu.dot_dimension_numbers<[1], [0], [0], [1], [0, 0, 1, 1], [], []>} : vector<2x256xbf16>, vector<256x64xbf16>, vector<2x64xf32> -> vector<2x64xf32>
    %58 = arith.addf %6, %57 : vector<2x64xf32>
    %59 = arith.truncf %58 : vector<2x64xf32> to vector<2x64xbf16>
    %c0_42 = arith.constant 0 : index
    %c0_43 = arith.constant 0 : index
    %60 = vector.load %arg4[%c0_42, %c0_43] : memref<64x64xbf16, #tpu.memory_space<vmem>>, vector<64x64xbf16>
    %cst_44 = arith.constant dense<0.000000e+00> : vector<2x64xf32>
    %61 = tpu.matmul %59, %60, %cst_44 {dimension_numbers = #tpu.dot_dimension_numbers<[1], [0], [0], [1], [0, 0, 1, 1], [], []>} : vector<2x64xbf16>, vector<64x64xbf16>, vector<2x64xf32> -> vector<2x64xf32>
    %c0_45 = arith.constant 0 : index
    %c0_46 = arith.constant 0 : index
    %62 = vector.load %arg5[%c0_45, %c0_46] : memref<1x64xf32, #tpu.memory_space<vmem>>, vector<1x64xf32>
    %63 = vector.broadcast %62 : vector<1x64xf32> to vector<2x64xf32>
    %64 = arith.addf %61, %63 : vector<2x64xf32>
    %cst_47 = arith.constant 0.000000e+00 : f32
    %65 = vector.broadcast %cst_47 : f32 to vector<2x64xf32>
    %66 = arith.maximumf %64, %65 : vector<2x64xf32>
    %67 = arith.truncf %66 : vector<2x64xf32> to vector<2x64xbf16>
    %c0_48 = arith.constant 0 : index
    %c0_49 = arith.constant 0 : index
    %68 = vector.load %arg6[%c0_48, %c0_49] : memref<64x64xbf16, #tpu.memory_space<vmem>>, vector<64x64xbf16>
    %cst_50 = arith.constant dense<0.000000e+00> : vector<2x64xf32>
    %69 = tpu.matmul %67, %68, %cst_50 {dimension_numbers = #tpu.dot_dimension_numbers<[1], [0], [0], [1], [0, 0, 1, 1], [], []>} : vector<2x64xbf16>, vector<64x64xbf16>, vector<2x64xf32> -> vector<2x64xf32>
    %c0_51 = arith.constant 0 : index
    %c0_52 = arith.constant 0 : index
    %70 = vector.load %arg7[%c0_51, %c0_52] : memref<1x64xf32, #tpu.memory_space<vmem>>, vector<1x64xf32>
    %71 = vector.broadcast %70 : vector<1x64xf32> to vector<2x64xf32>
    %72 = arith.addf %69, %71 : vector<2x64xf32>
    %cst_53 = arith.constant 0.000000e+00 : f32
    %73 = vector.broadcast %cst_53 : f32 to vector<2x64xf32>
    %74 = arith.maximumf %72, %73 : vector<2x64xf32>
    %75 = arith.truncf %74 : vector<2x64xf32> to vector<2x64xbf16>
    %c0_54 = arith.constant 0 : index
    %c0_55 = arith.constant 0 : index
    %76 = vector.load %arg8[%c0_54, %c0_55] : memref<64x64xbf16, #tpu.memory_space<vmem>>, vector<64x64xbf16>
    %cst_56 = arith.constant dense<0.000000e+00> : vector<2x64xf32>
    %77 = tpu.matmul %75, %76, %cst_56 {dimension_numbers = #tpu.dot_dimension_numbers<[1], [0], [0], [1], [0, 0, 1, 1], [], []>} : vector<2x64xbf16>, vector<64x64xbf16>, vector<2x64xf32> -> vector<2x64xf32>
    %c0_57 = arith.constant 0 : index
    %c0_58 = arith.constant 0 : index
    %78 = vector.load %arg9[%c0_57, %c0_58] : memref<1x64xf32, #tpu.memory_space<vmem>>, vector<1x64xf32>
    %79 = vector.broadcast %78 : vector<1x64xf32> to vector<2x64xf32>
    %80 = arith.addf %77, %79 : vector<2x64xf32>
    %cst_59 = arith.constant 0.000000e+00 : f32
    %81 = vector.broadcast %cst_59 : f32 to vector<2x64xf32>
    %82 = arith.maximumf %80, %81 : vector<2x64xf32>
    %83 = arith.truncf %82 : vector<2x64xf32> to vector<2x64xbf16>
    %c0_60 = arith.constant 0 : index
    %c0_61 = arith.constant 0 : index
    %84 = vector.load %arg10[%c0_60, %c0_61] : memref<64x64xbf16, #tpu.memory_space<vmem>>, vector<64x64xbf16>
    %cst_62 = arith.constant dense<0.000000e+00> : vector<2x64xf32>
    %85 = tpu.matmul %83, %84, %cst_62 {dimension_numbers = #tpu.dot_dimension_numbers<[1], [0], [0], [1], [0, 0, 1, 1], [], []>} : vector<2x64xbf16>, vector<64x64xbf16>, vector<2x64xf32> -> vector<2x64xf32>
    %c0_63 = arith.constant 0 : index
    %c0_64 = arith.constant 0 : index
    %86 = vector.load %arg11[%c0_63, %c0_64] : memref<1x64xf32, #tpu.memory_space<vmem>>, vector<1x64xf32>
    %87 = vector.broadcast %86 : vector<1x64xf32> to vector<2x64xf32>
    %88 = arith.addf %85, %87 : vector<2x64xf32>
    %cst_65 = arith.constant 0.000000e+00 : f32
    %89 = vector.broadcast %cst_65 : f32 to vector<2x64xf32>
    %90 = arith.maximumf %88, %89 : vector<2x64xf32>
    %91 = arith.truncf %90 : vector<2x64xf32> to vector<2x64xbf16>
    %c0_66 = arith.constant 0 : index
    %c0_67 = arith.constant 0 : index
    %92 = vector.load %arg12[%c0_66, %c0_67] : memref<64x256xbf16, #tpu.memory_space<vmem>>, vector<64x256xbf16>
    %cst_68 = arith.constant dense<0.000000e+00> : vector<2x256xf32>
    %93 = tpu.matmul %91, %92, %cst_68 {dimension_numbers = #tpu.dot_dimension_numbers<[1], [0], [0], [1], [0, 0, 1, 1], [], []>} : vector<2x64xbf16>, vector<64x256xbf16>, vector<2x256xf32> -> vector<2x256xf32>
    %c0_69 = arith.constant 0 : index
    %c0_70 = arith.constant 0 : index
    %94 = vector.load %arg13[%c0_69, %c0_70] : memref<1x256xf32, #tpu.memory_space<vmem>>, vector<1x256xf32>
    %95 = vector.broadcast %94 : vector<1x256xf32> to vector<2x256xf32>
    %96 = arith.addf %93, %95 : vector<2x256xf32>
    %97 = vector.extract_strided_slice %13 {offsets = [1, 0, 0], sizes = [1, 2, 256], strides = [1, 1, 1]} : vector<7x2x256xf32> to vector<1x2x256xf32>
    %98 = vector.shape_cast %97 : vector<1x2x256xf32> to vector<2x256xf32>
    %99 = arith.mulf %96, %98 : vector<2x256xf32>
    %100 = arith.truncf %99 : vector<2x256xf32> to vector<2x256xbf16>
    %c0_71 = arith.constant 0 : index
    %c0_72 = arith.constant 0 : index
    %101 = vector.load %arg15[%c0_71, %c0_72] : memref<256x64xbf16, #tpu.memory_space<vmem>>, vector<256x64xbf16>
    %cst_73 = arith.constant dense<0.000000e+00> : vector<2x64xf32>
    %102 = tpu.matmul %100, %101, %cst_73 {dimension_numbers = #tpu.dot_dimension_numbers<[1], [0], [0], [1], [0, 0, 1, 1], [], []>} : vector<2x256xbf16>, vector<256x64xbf16>, vector<2x64xf32> -> vector<2x64xf32>
    %103 = arith.addf %58, %102 : vector<2x64xf32>
    %104 = arith.truncf %103 : vector<2x64xf32> to vector<2x64xbf16>
    %c0_74 = arith.constant 0 : index
    %c0_75 = arith.constant 0 : index
    %105 = vector.load %arg4[%c0_74, %c0_75] : memref<64x64xbf16, #tpu.memory_space<vmem>>, vector<64x64xbf16>
    %cst_76 = arith.constant dense<0.000000e+00> : vector<2x64xf32>
    %106 = tpu.matmul %104, %105, %cst_76 {dimension_numbers = #tpu.dot_dimension_numbers<[1], [0], [0], [1], [0, 0, 1, 1], [], []>} : vector<2x64xbf16>, vector<64x64xbf16>, vector<2x64xf32> -> vector<2x64xf32>
    %c0_77 = arith.constant 0 : index
    %c0_78 = arith.constant 0 : index
    %107 = vector.load %arg5[%c0_77, %c0_78] : memref<1x64xf32, #tpu.memory_space<vmem>>, vector<1x64xf32>
    %108 = vector.broadcast %107 : vector<1x64xf32> to vector<2x64xf32>
    %109 = arith.addf %106, %108 : vector<2x64xf32>
    %cst_79 = arith.constant 0.000000e+00 : f32
    %110 = vector.broadcast %cst_79 : f32 to vector<2x64xf32>
    %111 = arith.maximumf %109, %110 : vector<2x64xf32>
    %112 = arith.truncf %111 : vector<2x64xf32> to vector<2x64xbf16>
    %c0_80 = arith.constant 0 : index
    %c0_81 = arith.constant 0 : index
    %113 = vector.load %arg6[%c0_80, %c0_81] : memref<64x64xbf16, #tpu.memory_space<vmem>>, vector<64x64xbf16>
    %cst_82 = arith.constant dense<0.000000e+00> : vector<2x64xf32>
    %114 = tpu.matmul %112, %113, %cst_82 {dimension_numbers = #tpu.dot_dimension_numbers<[1], [0], [0], [1], [0, 0, 1, 1], [], []>} : vector<2x64xbf16>, vector<64x64xbf16>, vector<2x64xf32> -> vector<2x64xf32>
    %c0_83 = arith.constant 0 : index
    %c0_84 = arith.constant 0 : index
    %115 = vector.load %arg7[%c0_83, %c0_84] : memref<1x64xf32, #tpu.memory_space<vmem>>, vector<1x64xf32>
    %116 = vector.broadcast %115 : vector<1x64xf32> to vector<2x64xf32>
    %117 = arith.addf %114, %116 : vector<2x64xf32>
    %cst_85 = arith.constant 0.000000e+00 : f32
    %118 = vector.broadcast %cst_85 : f32 to vector<2x64xf32>
    %119 = arith.maximumf %117, %118 : vector<2x64xf32>
    %120 = arith.truncf %119 : vector<2x64xf32> to vector<2x64xbf16>
    %c0_86 = arith.constant 0 : index
    %c0_87 = arith.constant 0 : index
    %121 = vector.load %arg8[%c0_86, %c0_87] : memref<64x64xbf16, #tpu.memory_space<vmem>>, vector<64x64xbf16>
    %cst_88 = arith.constant dense<0.000000e+00> : vector<2x64xf32>
    %122 = tpu.matmul %120, %121, %cst_88 {dimension_numbers = #tpu.dot_dimension_numbers<[1], [0], [0], [1], [0, 0, 1, 1], [], []>} : vector<2x64xbf16>, vector<64x64xbf16>, vector<2x64xf32> -> vector<2x64xf32>
    %c0_89 = arith.constant 0 : index
    %c0_90 = arith.constant 0 : index
    %123 = vector.load %arg9[%c0_89, %c0_90] : memref<1x64xf32, #tpu.memory_space<vmem>>, vector<1x64xf32>
    %124 = vector.broadcast %123 : vector<1x64xf32> to vector<2x64xf32>
    %125 = arith.addf %122, %124 : vector<2x64xf32>
    %cst_91 = arith.constant 0.000000e+00 : f32
    %126 = vector.broadcast %cst_91 : f32 to vector<2x64xf32>
    %127 = arith.maximumf %125, %126 : vector<2x64xf32>
    %128 = arith.truncf %127 : vector<2x64xf32> to vector<2x64xbf16>
    %c0_92 = arith.constant 0 : index
    %c0_93 = arith.constant 0 : index
    %129 = vector.load %arg10[%c0_92, %c0_93] : memref<64x64xbf16, #tpu.memory_space<vmem>>, vector<64x64xbf16>
    %cst_94 = arith.constant dense<0.000000e+00> : vector<2x64xf32>
    %130 = tpu.matmul %128, %129, %cst_94 {dimension_numbers = #tpu.dot_dimension_numbers<[1], [0], [0], [1], [0, 0, 1, 1], [], []>} : vector<2x64xbf16>, vector<64x64xbf16>, vector<2x64xf32> -> vector<2x64xf32>
    %c0_95 = arith.constant 0 : index
    %c0_96 = arith.constant 0 : index
    %131 = vector.load %arg11[%c0_95, %c0_96] : memref<1x64xf32, #tpu.memory_space<vmem>>, vector<1x64xf32>
    %132 = vector.broadcast %131 : vector<1x64xf32> to vector<2x64xf32>
    %133 = arith.addf %130, %132 : vector<2x64xf32>
    %cst_97 = arith.constant 0.000000e+00 : f32
    %134 = vector.broadcast %cst_97 : f32 to vector<2x64xf32>
    %135 = arith.maximumf %133, %134 : vector<2x64xf32>
    %136 = arith.truncf %135 : vector<2x64xf32> to vector<2x64xbf16>
    %c0_98 = arith.constant 0 : index
    %c0_99 = arith.constant 0 : index
    %137 = vector.load %arg12[%c0_98, %c0_99] : memref<64x256xbf16, #tpu.memory_space<vmem>>, vector<64x256xbf16>
    %cst_100 = arith.constant dense<0.000000e+00> : vector<2x256xf32>
    %138 = tpu.matmul %136, %137, %cst_100 {dimension_numbers = #tpu.dot_dimension_numbers<[1], [0], [0], [1], [0, 0, 1, 1], [], []>} : vector<2x64xbf16>, vector<64x256xbf16>, vector<2x256xf32> -> vector<2x256xf32>
    %c0_101 = arith.constant 0 : index
    %c0_102 = arith.constant 0 : index
    %139 = vector.load %arg13[%c0_101, %c0_102] : memref<1x256xf32, #tpu.memory_space<vmem>>, vector<1x256xf32>
    %140 = vector.broadcast %139 : vector<1x256xf32> to vector<2x256xf32>
    %141 = arith.addf %138, %140 : vector<2x256xf32>
    %142 = vector.extract_strided_slice %13 {offsets = [2, 0, 0], sizes = [1, 2, 256], strides = [1, 1, 1]} : vector<7x2x256xf32> to vector<1x2x256xf32>
    %143 = vector.shape_cast %142 : vector<1x2x256xf32> to vector<2x256xf32>
    %144 = arith.mulf %141, %143 : vector<2x256xf32>
    %145 = arith.truncf %144 : vector<2x256xf32> to vector<2x256xbf16>
    %c0_103 = arith.constant 0 : index
    %c0_104 = arith.constant 0 : index
    %146 = vector.load %arg15[%c0_103, %c0_104] : memref<256x64xbf16, #tpu.memory_space<vmem>>, vector<256x64xbf16>
    %cst_105 = arith.constant dense<0.000000e+00> : vector<2x64xf32>
    %147 = tpu.matmul %145, %146, %cst_105 {dimension_numbers = #tpu.dot_dimension_numbers<[1], [0], [0], [1], [0, 0, 1, 1], [], []>} : vector<2x256xbf16>, vector<256x64xbf16>, vector<2x64xf32> -> vector<2x64xf32>
    %148 = arith.addf %103, %147 : vector<2x64xf32>
    %149 = arith.truncf %148 : vector<2x64xf32> to vector<2x64xbf16>
    %c0_106 = arith.constant 0 : index
    %c0_107 = arith.constant 0 : index
    %150 = vector.load %arg4[%c0_106, %c0_107] : memref<64x64xbf16, #tpu.memory_space<vmem>>, vector<64x64xbf16>
    %cst_108 = arith.constant dense<0.000000e+00> : vector<2x64xf32>
    %151 = tpu.matmul %149, %150, %cst_108 {dimension_numbers = #tpu.dot_dimension_numbers<[1], [0], [0], [1], [0, 0, 1, 1], [], []>} : vector<2x64xbf16>, vector<64x64xbf16>, vector<2x64xf32> -> vector<2x64xf32>
    %c0_109 = arith.constant 0 : index
    %c0_110 = arith.constant 0 : index
    %152 = vector.load %arg5[%c0_109, %c0_110] : memref<1x64xf32, #tpu.memory_space<vmem>>, vector<1x64xf32>
    %153 = vector.broadcast %152 : vector<1x64xf32> to vector<2x64xf32>
    %154 = arith.addf %151, %153 : vector<2x64xf32>
    %cst_111 = arith.constant 0.000000e+00 : f32
    %155 = vector.broadcast %cst_111 : f32 to vector<2x64xf32>
    %156 = arith.maximumf %154, %155 : vector<2x64xf32>
    %157 = arith.truncf %156 : vector<2x64xf32> to vector<2x64xbf16>
    %c0_112 = arith.constant 0 : index
    %c0_113 = arith.constant 0 : index
    %158 = vector.load %arg6[%c0_112, %c0_113] : memref<64x64xbf16, #tpu.memory_space<vmem>>, vector<64x64xbf16>
    %cst_114 = arith.constant dense<0.000000e+00> : vector<2x64xf32>
    %159 = tpu.matmul %157, %158, %cst_114 {dimension_numbers = #tpu.dot_dimension_numbers<[1], [0], [0], [1], [0, 0, 1, 1], [], []>} : vector<2x64xbf16>, vector<64x64xbf16>, vector<2x64xf32> -> vector<2x64xf32>
    %c0_115 = arith.constant 0 : index
    %c0_116 = arith.constant 0 : index
    %160 = vector.load %arg7[%c0_115, %c0_116] : memref<1x64xf32, #tpu.memory_space<vmem>>, vector<1x64xf32>
    %161 = vector.broadcast %160 : vector<1x64xf32> to vector<2x64xf32>
    %162 = arith.addf %159, %161 : vector<2x64xf32>
    %cst_117 = arith.constant 0.000000e+00 : f32
    %163 = vector.broadcast %cst_117 : f32 to vector<2x64xf32>
    %164 = arith.maximumf %162, %163 : vector<2x64xf32>
    %165 = arith.truncf %164 : vector<2x64xf32> to vector<2x64xbf16>
    %c0_118 = arith.constant 0 : index
    %c0_119 = arith.constant 0 : index
    %166 = vector.load %arg8[%c0_118, %c0_119] : memref<64x64xbf16, #tpu.memory_space<vmem>>, vector<64x64xbf16>
    %cst_120 = arith.constant dense<0.000000e+00> : vector<2x64xf32>
    %167 = tpu.matmul %165, %166, %cst_120 {dimension_numbers = #tpu.dot_dimension_numbers<[1], [0], [0], [1], [0, 0, 1, 1], [], []>} : vector<2x64xbf16>, vector<64x64xbf16>, vector<2x64xf32> -> vector<2x64xf32>
    %c0_121 = arith.constant 0 : index
    %c0_122 = arith.constant 0 : index
    %168 = vector.load %arg9[%c0_121, %c0_122] : memref<1x64xf32, #tpu.memory_space<vmem>>, vector<1x64xf32>
    %169 = vector.broadcast %168 : vector<1x64xf32> to vector<2x64xf32>
    %170 = arith.addf %167, %169 : vector<2x64xf32>
    %cst_123 = arith.constant 0.000000e+00 : f32
    %171 = vector.broadcast %cst_123 : f32 to vector<2x64xf32>
    %172 = arith.maximumf %170, %171 : vector<2x64xf32>
    %173 = arith.truncf %172 : vector<2x64xf32> to vector<2x64xbf16>
    %c0_124 = arith.constant 0 : index
    %c0_125 = arith.constant 0 : index
    %174 = vector.load %arg10[%c0_124, %c0_125] : memref<64x64xbf16, #tpu.memory_space<vmem>>, vector<64x64xbf16>
    %cst_126 = arith.constant dense<0.000000e+00> : vector<2x64xf32>
    %175 = tpu.matmul %173, %174, %cst_126 {dimension_numbers = #tpu.dot_dimension_numbers<[1], [0], [0], [1], [0, 0, 1, 1], [], []>} : vector<2x64xbf16>, vector<64x64xbf16>, vector<2x64xf32> -> vector<2x64xf32>
    %c0_127 = arith.constant 0 : index
    %c0_128 = arith.constant 0 : index
    %176 = vector.load %arg11[%c0_127, %c0_128] : memref<1x64xf32, #tpu.memory_space<vmem>>, vector<1x64xf32>
    %177 = vector.broadcast %176 : vector<1x64xf32> to vector<2x64xf32>
    %178 = arith.addf %175, %177 : vector<2x64xf32>
    %cst_129 = arith.constant 0.000000e+00 : f32
    %179 = vector.broadcast %cst_129 : f32 to vector<2x64xf32>
    %180 = arith.maximumf %178, %179 : vector<2x64xf32>
    %181 = arith.truncf %180 : vector<2x64xf32> to vector<2x64xbf16>
    %c0_130 = arith.constant 0 : index
    %c0_131 = arith.constant 0 : index
    %182 = vector.load %arg12[%c0_130, %c0_131] : memref<64x256xbf16, #tpu.memory_space<vmem>>, vector<64x256xbf16>
    %cst_132 = arith.constant dense<0.000000e+00> : vector<2x256xf32>
    %183 = tpu.matmul %181, %182, %cst_132 {dimension_numbers = #tpu.dot_dimension_numbers<[1], [0], [0], [1], [0, 0, 1, 1], [], []>} : vector<2x64xbf16>, vector<64x256xbf16>, vector<2x256xf32> -> vector<2x256xf32>
    %c0_133 = arith.constant 0 : index
    %c0_134 = arith.constant 0 : index
    %184 = vector.load %arg13[%c0_133, %c0_134] : memref<1x256xf32, #tpu.memory_space<vmem>>, vector<1x256xf32>
    %185 = vector.broadcast %184 : vector<1x256xf32> to vector<2x256xf32>
    %186 = arith.addf %183, %185 : vector<2x256xf32>
    %187 = vector.extract_strided_slice %13 {offsets = [3, 0, 0], sizes = [1, 2, 256], strides = [1, 1, 1]} : vector<7x2x256xf32> to vector<1x2x256xf32>
    %188 = vector.shape_cast %187 : vector<1x2x256xf32> to vector<2x256xf32>
    %189 = arith.mulf %186, %188 : vector<2x256xf32>
    %190 = arith.truncf %189 : vector<2x256xf32> to vector<2x256xbf16>
    %c0_135 = arith.constant 0 : index
    %c0_136 = arith.constant 0 : index
    %191 = vector.load %arg15[%c0_135, %c0_136] : memref<256x64xbf16, #tpu.memory_space<vmem>>, vector<256x64xbf16>
    %cst_137 = arith.constant dense<0.000000e+00> : vector<2x64xf32>
    %192 = tpu.matmul %190, %191, %cst_137 {dimension_numbers = #tpu.dot_dimension_numbers<[1], [0], [0], [1], [0, 0, 1, 1], [], []>} : vector<2x256xbf16>, vector<256x64xbf16>, vector<2x64xf32> -> vector<2x64xf32>
    %193 = arith.addf %148, %192 : vector<2x64xf32>
    %194 = arith.truncf %193 : vector<2x64xf32> to vector<2x64xbf16>
    %c0_138 = arith.constant 0 : index
    %c0_139 = arith.constant 0 : index
    %195 = vector.load %arg4[%c0_138, %c0_139] : memref<64x64xbf16, #tpu.memory_space<vmem>>, vector<64x64xbf16>
    %cst_140 = arith.constant dense<0.000000e+00> : vector<2x64xf32>
    %196 = tpu.matmul %194, %195, %cst_140 {dimension_numbers = #tpu.dot_dimension_numbers<[1], [0], [0], [1], [0, 0, 1, 1], [], []>} : vector<2x64xbf16>, vector<64x64xbf16>, vector<2x64xf32> -> vector<2x64xf32>
    %c0_141 = arith.constant 0 : index
    %c0_142 = arith.constant 0 : index
    %197 = vector.load %arg5[%c0_141, %c0_142] : memref<1x64xf32, #tpu.memory_space<vmem>>, vector<1x64xf32>
    %198 = vector.broadcast %197 : vector<1x64xf32> to vector<2x64xf32>
    %199 = arith.addf %196, %198 : vector<2x64xf32>
    %cst_143 = arith.constant 0.000000e+00 : f32
    %200 = vector.broadcast %cst_143 : f32 to vector<2x64xf32>
    %201 = arith.maximumf %199, %200 : vector<2x64xf32>
    %202 = arith.truncf %201 : vector<2x64xf32> to vector<2x64xbf16>
    %c0_144 = arith.constant 0 : index
    %c0_145 = arith.constant 0 : index
    %203 = vector.load %arg6[%c0_144, %c0_145] : memref<64x64xbf16, #tpu.memory_space<vmem>>, vector<64x64xbf16>
    %cst_146 = arith.constant dense<0.000000e+00> : vector<2x64xf32>
    %204 = tpu.matmul %202, %203, %cst_146 {dimension_numbers = #tpu.dot_dimension_numbers<[1], [0], [0], [1], [0, 0, 1, 1], [], []>} : vector<2x64xbf16>, vector<64x64xbf16>, vector<2x64xf32> -> vector<2x64xf32>
    %c0_147 = arith.constant 0 : index
    %c0_148 = arith.constant 0 : index
    %205 = vector.load %arg7[%c0_147, %c0_148] : memref<1x64xf32, #tpu.memory_space<vmem>>, vector<1x64xf32>
    %206 = vector.broadcast %205 : vector<1x64xf32> to vector<2x64xf32>
    %207 = arith.addf %204, %206 : vector<2x64xf32>
    %cst_149 = arith.constant 0.000000e+00 : f32
    %208 = vector.broadcast %cst_149 : f32 to vector<2x64xf32>
    %209 = arith.maximumf %207, %208 : vector<2x64xf32>
    %210 = arith.truncf %209 : vector<2x64xf32> to vector<2x64xbf16>
    %c0_150 = arith.constant 0 : index
    %c0_151 = arith.constant 0 : index
    %211 = vector.load %arg8[%c0_150, %c0_151] : memref<64x64xbf16, #tpu.memory_space<vmem>>, vector<64x64xbf16>
    %cst_152 = arith.constant dense<0.000000e+00> : vector<2x64xf32>
    %212 = tpu.matmul %210, %211, %cst_152 {dimension_numbers = #tpu.dot_dimension_numbers<[1], [0], [0], [1], [0, 0, 1, 1], [], []>} : vector<2x64xbf16>, vector<64x64xbf16>, vector<2x64xf32> -> vector<2x64xf32>
    %c0_153 = arith.constant 0 : index
    %c0_154 = arith.constant 0 : index
    %213 = vector.load %arg9[%c0_153, %c0_154] : memref<1x64xf32, #tpu.memory_space<vmem>>, vector<1x64xf32>
    %214 = vector.broadcast %213 : vector<1x64xf32> to vector<2x64xf32>
    %215 = arith.addf %212, %214 : vector<2x64xf32>
    %cst_155 = arith.constant 0.000000e+00 : f32
    %216 = vector.broadcast %cst_155 : f32 to vector<2x64xf32>
    %217 = arith.maximumf %215, %216 : vector<2x64xf32>
    %218 = arith.truncf %217 : vector<2x64xf32> to vector<2x64xbf16>
    %c0_156 = arith.constant 0 : index
    %c0_157 = arith.constant 0 : index
    %219 = vector.load %arg10[%c0_156, %c0_157] : memref<64x64xbf16, #tpu.memory_space<vmem>>, vector<64x64xbf16>
    %cst_158 = arith.constant dense<0.000000e+00> : vector<2x64xf32>
    %220 = tpu.matmul %218, %219, %cst_158 {dimension_numbers = #tpu.dot_dimension_numbers<[1], [0], [0], [1], [0, 0, 1, 1], [], []>} : vector<2x64xbf16>, vector<64x64xbf16>, vector<2x64xf32> -> vector<2x64xf32>
    %c0_159 = arith.constant 0 : index
    %c0_160 = arith.constant 0 : index
    %221 = vector.load %arg11[%c0_159, %c0_160] : memref<1x64xf32, #tpu.memory_space<vmem>>, vector<1x64xf32>
    %222 = vector.broadcast %221 : vector<1x64xf32> to vector<2x64xf32>
    %223 = arith.addf %220, %222 : vector<2x64xf32>
    %cst_161 = arith.constant 0.000000e+00 : f32
    %224 = vector.broadcast %cst_161 : f32 to vector<2x64xf32>
    %225 = arith.maximumf %223, %224 : vector<2x64xf32>
    %226 = arith.truncf %225 : vector<2x64xf32> to vector<2x64xbf16>
    %c0_162 = arith.constant 0 : index
    %c0_163 = arith.constant 0 : index
    %227 = vector.load %arg12[%c0_162, %c0_163] : memref<64x256xbf16, #tpu.memory_space<vmem>>, vector<64x256xbf16>
    %cst_164 = arith.constant dense<0.000000e+00> : vector<2x256xf32>
    %228 = tpu.matmul %226, %227, %cst_164 {dimension_numbers = #tpu.dot_dimension_numbers<[1], [0], [0], [1], [0, 0, 1, 1], [], []>} : vector<2x64xbf16>, vector<64x256xbf16>, vector<2x256xf32> -> vector<2x256xf32>
    %c0_165 = arith.constant 0 : index
    %c0_166 = arith.constant 0 : index
    %229 = vector.load %arg13[%c0_165, %c0_166] : memref<1x256xf32, #tpu.memory_space<vmem>>, vector<1x256xf32>
    %230 = vector.broadcast %229 : vector<1x256xf32> to vector<2x256xf32>
    %231 = arith.addf %228, %230 : vector<2x256xf32>
    %232 = vector.extract_strided_slice %13 {offsets = [4, 0, 0], sizes = [1, 2, 256], strides = [1, 1, 1]} : vector<7x2x256xf32> to vector<1x2x256xf32>
    %233 = vector.shape_cast %232 : vector<1x2x256xf32> to vector<2x256xf32>
    %234 = arith.mulf %231, %233 : vector<2x256xf32>
    %235 = arith.truncf %234 : vector<2x256xf32> to vector<2x256xbf16>
    %c0_167 = arith.constant 0 : index
    %c0_168 = arith.constant 0 : index
    %236 = vector.load %arg15[%c0_167, %c0_168] : memref<256x64xbf16, #tpu.memory_space<vmem>>, vector<256x64xbf16>
    %cst_169 = arith.constant dense<0.000000e+00> : vector<2x64xf32>
    %237 = tpu.matmul %235, %236, %cst_169 {dimension_numbers = #tpu.dot_dimension_numbers<[1], [0], [0], [1], [0, 0, 1, 1], [], []>} : vector<2x256xbf16>, vector<256x64xbf16>, vector<2x64xf32> -> vector<2x64xf32>
    %238 = arith.addf %193, %237 : vector<2x64xf32>
    %239 = arith.truncf %238 : vector<2x64xf32> to vector<2x64xbf16>
    %c0_170 = arith.constant 0 : index
    %c0_171 = arith.constant 0 : index
    %240 = vector.load %arg4[%c0_170, %c0_171] : memref<64x64xbf16, #tpu.memory_space<vmem>>, vector<64x64xbf16>
    %cst_172 = arith.constant dense<0.000000e+00> : vector<2x64xf32>
    %241 = tpu.matmul %239, %240, %cst_172 {dimension_numbers = #tpu.dot_dimension_numbers<[1], [0], [0], [1], [0, 0, 1, 1], [], []>} : vector<2x64xbf16>, vector<64x64xbf16>, vector<2x64xf32> -> vector<2x64xf32>
    %c0_173 = arith.constant 0 : index
    %c0_174 = arith.constant 0 : index
    %242 = vector.load %arg5[%c0_173, %c0_174] : memref<1x64xf32, #tpu.memory_space<vmem>>, vector<1x64xf32>
    %243 = vector.broadcast %242 : vector<1x64xf32> to vector<2x64xf32>
    %244 = arith.addf %241, %243 : vector<2x64xf32>
    %cst_175 = arith.constant 0.000000e+00 : f32
    %245 = vector.broadcast %cst_175 : f32 to vector<2x64xf32>
    %246 = arith.maximumf %244, %245 : vector<2x64xf32>
    %247 = arith.truncf %246 : vector<2x64xf32> to vector<2x64xbf16>
    %c0_176 = arith.constant 0 : index
    %c0_177 = arith.constant 0 : index
    %248 = vector.load %arg6[%c0_176, %c0_177] : memref<64x64xbf16, #tpu.memory_space<vmem>>, vector<64x64xbf16>
    %cst_178 = arith.constant dense<0.000000e+00> : vector<2x64xf32>
    %249 = tpu.matmul %247, %248, %cst_178 {dimension_numbers = #tpu.dot_dimension_numbers<[1], [0], [0], [1], [0, 0, 1, 1], [], []>} : vector<2x64xbf16>, vector<64x64xbf16>, vector<2x64xf32> -> vector<2x64xf32>
    %c0_179 = arith.constant 0 : index
    %c0_180 = arith.constant 0 : index
    %250 = vector.load %arg7[%c0_179, %c0_180] : memref<1x64xf32, #tpu.memory_space<vmem>>, vector<1x64xf32>
    %251 = vector.broadcast %250 : vector<1x64xf32> to vector<2x64xf32>
    %252 = arith.addf %249, %251 : vector<2x64xf32>
    %cst_181 = arith.constant 0.000000e+00 : f32
    %253 = vector.broadcast %cst_181 : f32 to vector<2x64xf32>
    %254 = arith.maximumf %252, %253 : vector<2x64xf32>
    %255 = arith.truncf %254 : vector<2x64xf32> to vector<2x64xbf16>
    %c0_182 = arith.constant 0 : index
    %c0_183 = arith.constant 0 : index
    %256 = vector.load %arg8[%c0_182, %c0_183] : memref<64x64xbf16, #tpu.memory_space<vmem>>, vector<64x64xbf16>
    %cst_184 = arith.constant dense<0.000000e+00> : vector<2x64xf32>
    %257 = tpu.matmul %255, %256, %cst_184 {dimension_numbers = #tpu.dot_dimension_numbers<[1], [0], [0], [1], [0, 0, 1, 1], [], []>} : vector<2x64xbf16>, vector<64x64xbf16>, vector<2x64xf32> -> vector<2x64xf32>
    %c0_185 = arith.constant 0 : index
    %c0_186 = arith.constant 0 : index
    %258 = vector.load %arg9[%c0_185, %c0_186] : memref<1x64xf32, #tpu.memory_space<vmem>>, vector<1x64xf32>
    %259 = vector.broadcast %258 : vector<1x64xf32> to vector<2x64xf32>
    %260 = arith.addf %257, %259 : vector<2x64xf32>
    %cst_187 = arith.constant 0.000000e+00 : f32
    %261 = vector.broadcast %cst_187 : f32 to vector<2x64xf32>
    %262 = arith.maximumf %260, %261 : vector<2x64xf32>
    %263 = arith.truncf %262 : vector<2x64xf32> to vector<2x64xbf16>
    %c0_188 = arith.constant 0 : index
    %c0_189 = arith.constant 0 : index
    %264 = vector.load %arg10[%c0_188, %c0_189] : memref<64x64xbf16, #tpu.memory_space<vmem>>, vector<64x64xbf16>
    %cst_190 = arith.constant dense<0.000000e+00> : vector<2x64xf32>
    %265 = tpu.matmul %263, %264, %cst_190 {dimension_numbers = #tpu.dot_dimension_numbers<[1], [0], [0], [1], [0, 0, 1, 1], [], []>} : vector<2x64xbf16>, vector<64x64xbf16>, vector<2x64xf32> -> vector<2x64xf32>
    %c0_191 = arith.constant 0 : index
    %c0_192 = arith.constant 0 : index
    %266 = vector.load %arg11[%c0_191, %c0_192] : memref<1x64xf32, #tpu.memory_space<vmem>>, vector<1x64xf32>
    %267 = vector.broadcast %266 : vector<1x64xf32> to vector<2x64xf32>
    %268 = arith.addf %265, %267 : vector<2x64xf32>
    %cst_193 = arith.constant 0.000000e+00 : f32
    %269 = vector.broadcast %cst_193 : f32 to vector<2x64xf32>
    %270 = arith.maximumf %268, %269 : vector<2x64xf32>
    %271 = arith.truncf %270 : vector<2x64xf32> to vector<2x64xbf16>
    %c0_194 = arith.constant 0 : index
    %c0_195 = arith.constant 0 : index
    %272 = vector.load %arg12[%c0_194, %c0_195] : memref<64x256xbf16, #tpu.memory_space<vmem>>, vector<64x256xbf16>
    %cst_196 = arith.constant dense<0.000000e+00> : vector<2x256xf32>
    %273 = tpu.matmul %271, %272, %cst_196 {dimension_numbers = #tpu.dot_dimension_numbers<[1], [0], [0], [1], [0, 0, 1, 1], [], []>} : vector<2x64xbf16>, vector<64x256xbf16>, vector<2x256xf32> -> vector<2x256xf32>
    %c0_197 = arith.constant 0 : index
    %c0_198 = arith.constant 0 : index
    %274 = vector.load %arg13[%c0_197, %c0_198] : memref<1x256xf32, #tpu.memory_space<vmem>>, vector<1x256xf32>
    %275 = vector.broadcast %274 : vector<1x256xf32> to vector<2x256xf32>
    %276 = arith.addf %273, %275 : vector<2x256xf32>
    %277 = vector.extract_strided_slice %13 {offsets = [5, 0, 0], sizes = [1, 2, 256], strides = [1, 1, 1]} : vector<7x2x256xf32> to vector<1x2x256xf32>
    %278 = vector.shape_cast %277 : vector<1x2x256xf32> to vector<2x256xf32>
    %279 = arith.mulf %276, %278 : vector<2x256xf32>
    %280 = arith.truncf %279 : vector<2x256xf32> to vector<2x256xbf16>
    %c0_199 = arith.constant 0 : index
    %c0_200 = arith.constant 0 : index
    %281 = vector.load %arg15[%c0_199, %c0_200] : memref<256x64xbf16, #tpu.memory_space<vmem>>, vector<256x64xbf16>
    %cst_201 = arith.constant dense<0.000000e+00> : vector<2x64xf32>
    %282 = tpu.matmul %280, %281, %cst_201 {dimension_numbers = #tpu.dot_dimension_numbers<[1], [0], [0], [1], [0, 0, 1, 1], [], []>} : vector<2x256xbf16>, vector<256x64xbf16>, vector<2x64xf32> -> vector<2x64xf32>
    %283 = arith.addf %238, %282 : vector<2x64xf32>
    %284 = arith.truncf %283 : vector<2x64xf32> to vector<2x64xbf16>
    %c0_202 = arith.constant 0 : index
    %c0_203 = arith.constant 0 : index
    %285 = vector.load %arg4[%c0_202, %c0_203] : memref<64x64xbf16, #tpu.memory_space<vmem>>, vector<64x64xbf16>
    %cst_204 = arith.constant dense<0.000000e+00> : vector<2x64xf32>
    %286 = tpu.matmul %284, %285, %cst_204 {dimension_numbers = #tpu.dot_dimension_numbers<[1], [0], [0], [1], [0, 0, 1, 1], [], []>} : vector<2x64xbf16>, vector<64x64xbf16>, vector<2x64xf32> -> vector<2x64xf32>
    %c0_205 = arith.constant 0 : index
    %c0_206 = arith.constant 0 : index
    %287 = vector.load %arg5[%c0_205, %c0_206] : memref<1x64xf32, #tpu.memory_space<vmem>>, vector<1x64xf32>
    %288 = vector.broadcast %287 : vector<1x64xf32> to vector<2x64xf32>
    %289 = arith.addf %286, %288 : vector<2x64xf32>
    %cst_207 = arith.constant 0.000000e+00 : f32
    %290 = vector.broadcast %cst_207 : f32 to vector<2x64xf32>
    %291 = arith.maximumf %289, %290 : vector<2x64xf32>
    %292 = arith.truncf %291 : vector<2x64xf32> to vector<2x64xbf16>
    %c0_208 = arith.constant 0 : index
    %c0_209 = arith.constant 0 : index
    %293 = vector.load %arg6[%c0_208, %c0_209] : memref<64x64xbf16, #tpu.memory_space<vmem>>, vector<64x64xbf16>
    %cst_210 = arith.constant dense<0.000000e+00> : vector<2x64xf32>
    %294 = tpu.matmul %292, %293, %cst_210 {dimension_numbers = #tpu.dot_dimension_numbers<[1], [0], [0], [1], [0, 0, 1, 1], [], []>} : vector<2x64xbf16>, vector<64x64xbf16>, vector<2x64xf32> -> vector<2x64xf32>
    %c0_211 = arith.constant 0 : index
    %c0_212 = arith.constant 0 : index
    %295 = vector.load %arg7[%c0_211, %c0_212] : memref<1x64xf32, #tpu.memory_space<vmem>>, vector<1x64xf32>
    %296 = vector.broadcast %295 : vector<1x64xf32> to vector<2x64xf32>
    %297 = arith.addf %294, %296 : vector<2x64xf32>
    %cst_213 = arith.constant 0.000000e+00 : f32
    %298 = vector.broadcast %cst_213 : f32 to vector<2x64xf32>
    %299 = arith.maximumf %297, %298 : vector<2x64xf32>
    %300 = arith.truncf %299 : vector<2x64xf32> to vector<2x64xbf16>
    %c0_214 = arith.constant 0 : index
    %c0_215 = arith.constant 0 : index
    %301 = vector.load %arg8[%c0_214, %c0_215] : memref<64x64xbf16, #tpu.memory_space<vmem>>, vector<64x64xbf16>
    %cst_216 = arith.constant dense<0.000000e+00> : vector<2x64xf32>
    %302 = tpu.matmul %300, %301, %cst_216 {dimension_numbers = #tpu.dot_dimension_numbers<[1], [0], [0], [1], [0, 0, 1, 1], [], []>} : vector<2x64xbf16>, vector<64x64xbf16>, vector<2x64xf32> -> vector<2x64xf32>
    %c0_217 = arith.constant 0 : index
    %c0_218 = arith.constant 0 : index
    %303 = vector.load %arg9[%c0_217, %c0_218] : memref<1x64xf32, #tpu.memory_space<vmem>>, vector<1x64xf32>
    %304 = vector.broadcast %303 : vector<1x64xf32> to vector<2x64xf32>
    %305 = arith.addf %302, %304 : vector<2x64xf32>
    %cst_219 = arith.constant 0.000000e+00 : f32
    %306 = vector.broadcast %cst_219 : f32 to vector<2x64xf32>
    %307 = arith.maximumf %305, %306 : vector<2x64xf32>
    %308 = arith.truncf %307 : vector<2x64xf32> to vector<2x64xbf16>
    %c0_220 = arith.constant 0 : index
    %c0_221 = arith.constant 0 : index
    %309 = vector.load %arg10[%c0_220, %c0_221] : memref<64x64xbf16, #tpu.memory_space<vmem>>, vector<64x64xbf16>
    %cst_222 = arith.constant dense<0.000000e+00> : vector<2x64xf32>
    %310 = tpu.matmul %308, %309, %cst_222 {dimension_numbers = #tpu.dot_dimension_numbers<[1], [0], [0], [1], [0, 0, 1, 1], [], []>} : vector<2x64xbf16>, vector<64x64xbf16>, vector<2x64xf32> -> vector<2x64xf32>
    %c0_223 = arith.constant 0 : index
    %c0_224 = arith.constant 0 : index
    %311 = vector.load %arg11[%c0_223, %c0_224] : memref<1x64xf32, #tpu.memory_space<vmem>>, vector<1x64xf32>
    %312 = vector.broadcast %311 : vector<1x64xf32> to vector<2x64xf32>
    %313 = arith.addf %310, %312 : vector<2x64xf32>
    %cst_225 = arith.constant 0.000000e+00 : f32
    %314 = vector.broadcast %cst_225 : f32 to vector<2x64xf32>
    %315 = arith.maximumf %313, %314 : vector<2x64xf32>
    %316 = arith.truncf %315 : vector<2x64xf32> to vector<2x64xbf16>
    %c0_226 = arith.constant 0 : index
    %c0_227 = arith.constant 0 : index
    %317 = vector.load %arg12[%c0_226, %c0_227] : memref<64x256xbf16, #tpu.memory_space<vmem>>, vector<64x256xbf16>
    %cst_228 = arith.constant dense<0.000000e+00> : vector<2x256xf32>
    %318 = tpu.matmul %316, %317, %cst_228 {dimension_numbers = #tpu.dot_dimension_numbers<[1], [0], [0], [1], [0, 0, 1, 1], [], []>} : vector<2x64xbf16>, vector<64x256xbf16>, vector<2x256xf32> -> vector<2x256xf32>
    %c0_229 = arith.constant 0 : index
    %c0_230 = arith.constant 0 : index
    %319 = vector.load %arg13[%c0_229, %c0_230] : memref<1x256xf32, #tpu.memory_space<vmem>>, vector<1x256xf32>
    %320 = vector.broadcast %319 : vector<1x256xf32> to vector<2x256xf32>
    %321 = arith.addf %318, %320 : vector<2x256xf32>
    %322 = vector.extract_strided_slice %13 {offsets = [6, 0, 0], sizes = [1, 2, 256], strides = [1, 1, 1]} : vector<7x2x256xf32> to vector<1x2x256xf32>
    %323 = vector.shape_cast %322 : vector<1x2x256xf32> to vector<2x256xf32>
    %324 = arith.mulf %321, %323 : vector<2x256xf32>
    %325 = arith.truncf %324 : vector<2x256xf32> to vector<2x256xbf16>
    %c0_231 = arith.constant 0 : index
    %c0_232 = arith.constant 0 : index
    %326 = vector.load %arg15[%c0_231, %c0_232] : memref<256x64xbf16, #tpu.memory_space<vmem>>, vector<256x64xbf16>
    %cst_233 = arith.constant dense<0.000000e+00> : vector<2x64xf32>
    %327 = tpu.matmul %325, %326, %cst_233 {dimension_numbers = #tpu.dot_dimension_numbers<[1], [0], [0], [1], [0, 0, 1, 1], [], []>} : vector<2x256xbf16>, vector<256x64xbf16>, vector<2x64xf32> -> vector<2x64xf32>
    %328 = arith.addf %283, %327 : vector<2x64xf32>
    %329 = tpu.concatenate %6, %58, %103, %148, %193, %238, %283, %328 in 0 : vector<2x64xf32>, vector<2x64xf32>, vector<2x64xf32>, vector<2x64xf32>, vector<2x64xf32>, vector<2x64xf32>, vector<2x64xf32>, vector<2x64xf32> -> vector<16x64xf32>
    %330 = arith.truncf %329 : vector<16x64xf32> to vector<16x64xbf16>
    %c0_234 = arith.constant 0 : index
    %c0_235 = arith.constant 0 : index
    %331 = vector.load %arg16[%c0_234, %c0_235] : memref<64x128xbf16, #tpu.memory_space<vmem>>, vector<64x128xbf16>
    %cst_236 = arith.constant dense<0.000000e+00> : vector<16x128xf32>
    %332 = tpu.matmul %330, %331, %cst_236 {dimension_numbers = #tpu.dot_dimension_numbers<[1], [0], [0], [1], [0, 0, 1, 1], [], []>} : vector<16x64xbf16>, vector<64x128xbf16>, vector<16x128xf32> -> vector<16x128xf32>
    %c0_237 = arith.constant 0 : index
    %c0_238 = arith.constant 0 : index
    %333 = vector.load %arg17[%c0_237, %c0_238] : memref<1x128xf32, #tpu.memory_space<vmem>>, vector<1x128xf32>
    %334 = vector.broadcast %333 : vector<1x128xf32> to vector<16x128xf32>
    %335 = arith.addf %332, %334 : vector<16x128xf32>
    %336 = vector.shape_cast %335 : vector<16x128xf32> to vector<8x2x128xf32>
    %c0_239 = arith.constant 0 : index
    %c0_240 = arith.constant 0 : index
    %c0_241 = arith.constant 0 : index
    %337 = vector.load %arg18[%c0_239, %c0_240, %c0_241] : memref<8x2x128xf32, #tpu.memory_space<vmem>>, vector<8x2x128xf32>
    tpu.vector_store %arg18[%c0_239, %c0_240, %c0_241], %336 {strides = array<i32>} : memref<8x2x128xf32, #tpu.memory_space<vmem>>, vector<8x2x128xf32>,
    return
  }
  func.func @transform_0(%arg0: i32) -> (i32, i32, i32) {
    %c0_i32 = arith.constant 0 : i32
    %c0_i32_0 = arith.constant 0 : i32
    %c0_i32_1 = arith.constant 0 : i32
    return %c0_i32, %arg0, %c0_i32_0 : i32, i32, i32
  }
  func.func @transform_1(%arg0: i32) -> (i32, i32) {
    %c0_i32 = arith.constant 0 : i32
    %c0_i32_0 = arith.constant 0 : i32
    %c0_i32_1 = arith.constant 0 : i32
    return %c0_i32, %c0_i32_0 : i32, i32
  }
  func.func @transform_2(%arg0: i32) -> (i32, i32) {
    %c0_i32 = arith.constant 0 : i32
    %c0_i32_0 = arith.constant 0 : i32
    %c0_i32_1 = arith.constant 0 : i32
    return %c0_i32, %c0_i32_0 : i32, i32
  }
  func.func @transform_3(%arg0: i32) -> (i32, i32) {
    %c0_i32 = arith.constant 0 : i32
    %c0_i32_0 = arith.constant 0 : i32
    %c0_i32_1 = arith.constant 0 : i32
    return %c0_i32, %c0_i32_0 : i32, i32
  }
  func.func @transform_4(%arg0: i32) -> (i32, i32) {
    %c0_i32 = arith.constant 0 : i32
    %c0_i32_0 = arith.constant 0 : i32
    %c0_i32_1 = arith.constant 0 : i32
    return %c0_i32, %c0_i32_0 : i32, i32
  }
  func.func @transform_5(%arg0: i32) -> (i32, i32) {
    %c0_i32 = arith.constant 0 : i32
    %c0_i32_0 = arith.constant 0 : i32
    %c0_i32_1 = arith.constant 0 : i32
    return %c0_i32, %c0_i32_0 : i32, i32
  }
  func.func @transform_6(%arg0: i32) -> (i32, i32) {
    %c0_i32 = arith.constant 0 : i32
    %c0_i32_0 = arith.constant 0 : i32
    %c0_i32_1 = arith.constant 0 : i32
    return %c0_i32, %c0_i32_0 : i32, i32
  }
  func.func @transform_7(%arg0: i32) -> (i32, i32) {
    %c0_i32 = arith.constant 0 : i32
    %c0_i32_0 = arith.constant 0 : i32
    %c0_i32_1 = arith.constant 0 : i32
    return %c0_i32, %c0_i32_0 : i32, i32
  }
  func.func @transform_8(%arg0: i32) -> (i32, i32) {
    %c0_i32 = arith.constant 0 : i32
    %c0_i32_0 = arith.constant 0 : i32
    %c0_i32_1 = arith.constant 0 : i32
    return %c0_i32, %c0_i32_0 : i32, i32
  }
  func.func @transform_9(%arg0: i32) -> (i32, i32) {
    %c0_i32 = arith.constant 0 : i32
    %c0_i32_0 = arith.constant 0 : i32
    %c0_i32_1 = arith.constant 0 : i32
    return %c0_i32, %c0_i32_0 : i32, i32
  }
  func.func @transform_10(%arg0: i32) -> (i32, i32) {
    %c0_i32 = arith.constant 0 : i32
    %c0_i32_0 = arith.constant 0 : i32
    %c0_i32_1 = arith.constant 0 : i32
    return %c0_i32, %c0_i32_0 : i32, i32
  }
  func.func @transform_11(%arg0: i32) -> (i32, i32) {
    %c0_i32 = arith.constant 0 : i32
    %c0_i32_0 = arith.constant 0 : i32
    %c0_i32_1 = arith.constant 0 : i32
    return %c0_i32, %c0_i32_0 : i32, i32
  }
  func.func @transform_12(%arg0: i32) -> (i32, i32) {
    %c0_i32 = arith.constant 0 : i32
    %c0_i32_0 = arith.constant 0 : i32
    %c0_i32_1 = arith.constant 0 : i32
    return %c0_i32, %c0_i32_0 : i32, i32
  }
  func.func @transform_13(%arg0: i32) -> (i32, i32) {
    %c0_i32 = arith.constant 0 : i32
    %c0_i32_0 = arith.constant 0 : i32
    %c0_i32_1 = arith.constant 0 : i32
    return %c0_i32, %c0_i32_0 : i32, i32
  }
  func.func @transform_14(%arg0: i32) -> (i32, i32) {
    %c0_i32 = arith.constant 0 : i32
    %c0_i32_0 = arith.constant 0 : i32
    %c0_i32_1 = arith.constant 0 : i32
    return %c0_i32, %c0_i32_0 : i32, i32
  }
  func.func @transform_15(%arg0: i32) -> (i32, i32) {
    %c0_i32 = arith.constant 0 : i32
    %c0_i32_0 = arith.constant 0 : i32
    %c0_i32_1 = arith.constant 0 : i32
    return %c0_i32, %c0_i32_0 : i32, i32
  }
  func.func @transform_16(%arg0: i32) -> (i32, i32) {
    %c0_i32 = arith.constant 0 : i32
    %c0_i32_0 = arith.constant 0 : i32
    %c0_i32_1 = arith.constant 0 : i32
    return %c0_i32, %c0_i32_0 : i32, i32
  }
  func.func @transform_17(%arg0: i32) -> (i32, i32, i32) {
    %c0_i32 = arith.constant 0 : i32
    %c0_i32_0 = arith.constant 0 : i32
    %c0_i32_1 = arith.constant 0 : i32
    return %c0_i32, %arg0, %c0_i32_0 : i32, i32, i32
  }
}

</mosaic_0001>

<llo_original>
// kernel: neural_de_forward.1
$region0: #{neural_de_forward.1}
  #allocation0 [shape = 'u32[]', space=smem, size = 0x4, offset = 0x4, fixed_abs, tag = 'smem constant byte address 0x4 - core index']
  #allocation1 [shape = 'u32[72,128]{1,0:T(1,128)}', space=vmem, size = 0x9000, scoped, tag = 'internal scratch']
  %s0 = inlined_call_operand.vmem [shape: f32[8,2,4], index: 0, kind: input, shape index: {}]
  %s1 = inlined_call_operand.vmem [shape: f32[4,64], index: 1, kind: input, shape index: {}]
  %s2 = inlined_call_operand.vmem [shape: f32[1,64], index: 2, kind: input, shape index: {}]
  %s3 = inlined_call_operand.vmem [shape: bf16[64,64], index: 3, kind: input, shape index: {}]
  %s4 = inlined_call_operand.vmem [shape: f32[1,64], index: 4, kind: input, shape index: {}]
  %s5 = inlined_call_operand.vmem [shape: bf16[64,64], index: 5, kind: input, shape index: {}]
  %s6 = inlined_call_operand.vmem [shape: f32[1,64], index: 6, kind: input, shape index: {}]
  %s7 = inlined_call_operand.vmem [shape: bf16[64,64], index: 7, kind: input, shape index: {}]
  %s8 = inlined_call_operand.vmem [shape: f32[1,64], index: 8, kind: input, shape index: {}]
  %s9 = inlined_call_operand.vmem [shape: bf16[64,64], index: 9, kind: input, shape index: {}]
  %s10 = inlined_call_operand.vmem [shape: f32[1,64], index: 10, kind: input, shape index: {}]
  %s11 = inlined_call_operand.vmem [shape: bf16[64,256], index: 11, kind: input, shape index: {}]
  %s12 = inlined_call_operand.vmem [shape: f32[1,256], index: 12, kind: input, shape index: {}]
  %s13 = inlined_call_operand.vmem [shape: f32[4,256], index: 13, kind: input, shape index: {}]
  %s14 = inlined_call_operand.vmem [shape: bf16[256,64], index: 14, kind: input, shape index: {}]
  %s15 = inlined_call_operand.vmem [shape: bf16[64,128], index: 15, kind: input, shape index: {}]
  %s16 = inlined_call_operand.vmem [shape: f32[1,128], index: 16, kind: input, shape index: {}]
  %s17 = inlined_call_operand.vmem [shape: f32[8,2,128], index: 17, kind: output, shape index: {}]
  %s18 = sld [smem:[#allocation0]]
  $region78: #{neural_de_forward.1} parent=0
    _
  %s20 = ssub.s32 1, %s18
  %s21 = scalar_select 0, %s20, %s18
  // Predicated region
  $region2: #{neural_de_forward.1} parent=0 // pred_check
    _
  $region3: #{neural_de_forward.1} parent=0 // pred_check_branch
    %23 = sbr.rel (0) target = $region5
  $region4: #{neural_de_forward.1} parent=0 // pred_region
    _
  $region5: #{neural_de_forward.1} parent=0 // pred_fallthru
    _
  // Predicated region
  $region6: #{neural_de_forward.1} parent=0 // pred_check
    _
  $region7: #{neural_de_forward.1} parent=0 // pred_check_branch
    %25 = sbr.rel (0) target = $region9
  $region8: #{neural_de_forward.1} parent=0 // pred_region
    _
  $region9: #{neural_de_forward.1} parent=0 // pred_fallthru
    _
  // Predicated region
  $region10: #{neural_de_forward.1} parent=0 // pred_check
    _
  $region11: #{neural_de_forward.1} parent=0 // pred_check_branch
    %27 = sbr.rel (0) target = $region13
  $region12: #{neural_de_forward.1} parent=0 // pred_region
    _
  $region13: #{neural_de_forward.1} parent=0 // pred_fallthru
    _
  // Predicated region
  $region14: #{neural_de_forward.1} parent=0 // pred_check
    _
  $region15: #{neural_de_forward.1} parent=0 // pred_check_branch
    %29 = sbr.rel (0) target = $region17
  $region16: #{neural_de_forward.1} parent=0 // pred_region
    _
  $region17: #{neural_de_forward.1} parent=0 // pred_fallthru
    _
  // Predicated region
  $region18: #{neural_de_forward.1} parent=0 // pred_check
    _
  $region19: #{neural_de_forward.1} parent=0 // pred_check_branch
    %31 = sbr.rel (0) target = $region21
  $region20: #{neural_de_forward.1} parent=0 // pred_region
    _
  $region21: #{neural_de_forward.1} parent=0 // pred_fallthru
    _
  // Predicated region
  $region22: #{neural_de_forward.1} parent=0 // pred_check
    _
  $region23: #{neural_de_forward.1} parent=0 // pred_check_branch
    %33 = sbr.rel (0) target = $region25
  $region24: #{neural_de_forward.1} parent=0 // pred_region
    _
  $region25: #{neural_de_forward.1} parent=0 // pred_fallthru
    _
  // Predicated region
  $region26: #{neural_de_forward.1} parent=0 // pred_check
    _
  $region27: #{neural_de_forward.1} parent=0 // pred_check_branch
    %35 = sbr.rel (0) target = $region29
  $region28: #{neural_de_forward.1} parent=0 // pred_region
    _
  $region29: #{neural_de_forward.1} parent=0 // pred_fallthru
    _
  // Predicated region
  $region30: #{neural_de_forward.1} parent=0 // pred_check
    _
  $region31: #{neural_de_forward.1} parent=0 // pred_check_branch
    %37 = sbr.rel (0) target = $region33
  $region32: #{neural_de_forward.1} parent=0 // pred_region
    _
  $region33: #{neural_de_forward.1} parent=0 // pred_fallthru
    _
  // Predicated region
  $region34: #{neural_de_forward.1} parent=0 // pred_check
    _
  $region35: #{neural_de_forward.1} parent=0 // pred_check_branch
    %39 = sbr.rel (0) target = $region37
  $region36: #{neural_de_forward.1} parent=0 // pred_region
    _
  $region37: #{neural_de_forward.1} parent=0 // pred_fallthru
    _
  // Predicated region
  $region38: #{neural_de_forward.1} parent=0 // pred_check
    _
  $region39: #{neural_de_forward.1} parent=0 // pred_check_branch
    %41 = sbr.rel (0) target = $region41
  $region40: #{neural_de_forward.1} parent=0 // pred_region
    _
  $region41: #{neural_de_forward.1} parent=0 // pred_fallthru
    _
  // Predicated region
  $region42: #{neural_de_forward.1} parent=0 // pred_check
    _
  $region43: #{neural_de_forward.1} parent=0 // pred_check_branch
    %43 = sbr.rel (0) target = $region45
  $region44: #{neural_de_forward.1} parent=0 // pred_region
    _
  $region45: #{neural_de_forward.1} parent=0 // pred_fallthru
    _
  // Predicated region
  $region46: #{neural_de_forward.1} parent=0 // pred_check
    _
  $region47: #{neural_de_forward.1} parent=0 // pred_check_branch
    %45 = sbr.rel (0) target = $region49
  $region48: #{neural_de_forward.1} parent=0 // pred_region
    _
  $region49: #{neural_de_forward.1} parent=0 // pred_fallthru
    _
  // Predicated region
  $region50: #{neural_de_forward.1} parent=0 // pred_check
    _
  $region51: #{neural_de_forward.1} parent=0 // pred_check_branch
    %47 = sbr.rel (0) target = $region53
  $region52: #{neural_de_forward.1} parent=0 // pred_region
    _
  $region53: #{neural_de_forward.1} parent=0 // pred_fallthru
    _
  // Predicated region
  $region54: #{neural_de_forward.1} parent=0 // pred_check
    _
  $region55: #{neural_de_forward.1} parent=0 // pred_check_branch
    %49 = sbr.rel (0) target = $region57
  $region56: #{neural_de_forward.1} parent=0 // pred_region
    _
  $region57: #{neural_de_forward.1} parent=0 // pred_fallthru
    _
  // Predicated region
  $region58: #{neural_de_forward.1} parent=0 // pred_check
    _
  $region59: #{neural_de_forward.1} parent=0 // pred_check_branch
    %51 = sbr.rel (0) target = $region61
  $region60: #{neural_de_forward.1} parent=0 // pred_region
    _
  $region61: #{neural_de_forward.1} parent=0 // pred_fallthru
    _
  // Predicated region
  $region62: #{neural_de_forward.1} parent=0 // pred_check
    _
  $region63: #{neural_de_forward.1} parent=0 // pred_check_branch
    %53 = sbr.rel (0) target = $region65
  $region64: #{neural_de_forward.1} parent=0 // pred_region
    _
  $region65: #{neural_de_forward.1} parent=0 // pred_fallthru
    _
  // Predicated region
  $region66: #{neural_de_forward.1} parent=0 // pred_check
    _
  $region67: #{neural_de_forward.1} parent=0 // pred_check_branch
    %55 = sbr.rel (0) target = $region69
  $region68: #{neural_de_forward.1} parent=0 // pred_region
    _
  $region69: #{neural_de_forward.1} parent=0 // pred_fallthru
    _
  %v57 = vld [vmem:[%s0] sm:$0x3]
  %v58 = vld [vmem:[%s0 + $0x2] sm:$0x3]
  %v59 = vld [vmem:[%s0 + $0x4] sm:$0x3]
  %v60 = vld [vmem:[%s0 + $0x6] sm:$0x3]
  %v61 = vld [vmem:[%s0 + $0x8] sm:$0x3]
  %v62 = vld [vmem:[%s0 + $0xa] sm:$0x3]
  %v63 = vld [vmem:[%s0 + $0xc] sm:$0x3]
  %v64 = vld [vmem:[%s0 + $0xe] sm:$0x3]
  %vm65 = vcmask 25600
  %v66 = vsel %vm65, %v57, 0.0
  %v67 = vsel %vm65, %v58, 0.0
  %v68 = vadd.f32 %v66, %v67
  %v69 = vsel %vm65, %v59, 0.0
  %v70 = vadd.f32 %v68, %v69
  %v71 = vsel %vm65, %v60, 0.0
  %v72 = vadd.f32 %v70, %v71
  %v73 = vsel %vm65, %v61, 0.0
  %v74 = vadd.f32 %v72, %v73
  %v75 = vsel %vm65, %v62, 0.0
  %v76 = vadd.f32 %v74, %v75
  %v77 = vsel %vm65, %v63, 0.0
  %v78 = vadd.f32 %v76, %v77
  %v79 = vsel %vm65, %v64, 0.0
  %v80 = vadd.f32 %v78, %v79
  %v81 = vld [vmem:[%s1] sm:$0xf]
  %v82 = vld [vmem:[%s2] sm:$0x1]
  %v84 = vperm.slane %v82, 0
  %vm86 = vcmask 31744
  %v88 = vsel %vm86, %v80, 0
  %vm90 = vcmask 1043456
  %v92 = vsel %vm90, %v81, 0
  %94 = vmatpush.msra.mxu0 0.0
  %95 = vmatpush.msra.mxu0 0.0
  %96 = vmatpush.msra.mxu0 0.0
  %97 = vmatpush.msra.mxu0 0.0
  %98 = vmatpush.msra.mxu0 0.0
  %99 = vmatpush.msra.mxu0 0.0
  %100 = vmatpush.msra.mxu0 0.0
  %101 = vmatpush.msra.mxu0 0.0
  %102 = vmatpush.msra.mxu0 0.0
  %103 = vmatpush.msra.mxu0 0.0
  %104 = vmatpush.msra.mxu0 0.0
  %105 = vmatpush.msra.mxu0 0.0
  %106 = vmatpush.msra.mxu0 0.0
  %107 = vmatpush.msra.mxu0 0.0
  %108 = vmatpush.msra.mxu0 0.0
  %109 = vmatpush.msra.mxu0 %v92
  %110 = vmatmul.f32.gmra.mxu0 %v88
  %v111 = vpop.f32.mrf.mxu0
  %v112 = vadd.f32 %v84, %v111
  %113 = vdwg.mxu0
  %v114 = vsub.f32 %v58, %v57
  %v115 = vsub.f32 %v59, %v58
  %v116 = vsub.f32 %v60, %v59
  %v117 = vsub.f32 %v61, %v60
  %v118 = vsub.f32 %v62, %v61
  %v119 = vsub.f32 %v63, %v62
  %v120 = vsub.f32 %v64, %v63
  %v121 = vld [vmem:[%s13] sm:$0xff]
  %129 = vst [vmem:[#allocation1] ss:$4 sm:$0xff] %v114
  %s130 = scalar_lea.vmem [#allocation1], 1
  %131 = vst [vmem:[%s130] ss:$4 sm:$0xff] %v115
  %s132 = scalar_lea.vmem [#allocation1], 2
  %133 = vst [vmem:[%s132] ss:$4 sm:$0xff] %v116
  %s134 = scalar_lea.vmem [#allocation1], 3
  %135 = vst [vmem:[%s134] ss:$4 sm:$0xff] %v117
  %s136 = scalar_lea.vmem [#allocation1], 32
  %137 = vst [vmem:[%s136] ss:$4 sm:$0xff] %v118
  %s138 = scalar_lea.vmem [#allocation1], 33
  %139 = vst [vmem:[%s138] ss:$4 sm:$0xff] %v119
  %s140 = scalar_lea.vmem [#allocation1], 34
  %141 = vst [vmem:[%s140] ss:$4 sm:$0xff] %v120
  %v142 = vld.sshfl [vmem:[#allocation1] sm:$0xff pattern:$0x73625140]
  %v143 = vld.sshfl [vmem:[#allocation1 + $0x20] sm:$0xff pattern:$0x73625140]
  %145 = vst [vmem:[#allocation1] ss:$2 sm:$0xff] %v121
  %v146 = vld.sshfl [vmem:[#allocation1] sm:$0xff pattern:$0x75316420]
  %v147 = vld.sshfl [vmem:[#allocation1 + $0x8] sm:$0xff pattern:$0x75316420]
  %v148 = vsel %vm86, %v142, 0
  %v150 = vsel %vm86, %v143, 0
  %v152 = vsel %vm90, %v146, 0
  %v154 = vsel %vm90, %v147, 0
  %156 = vmatpush.msra.mxu0 0.0
  %157 = vmatpush.msra.mxu0 0.0
  %158 = vmatpush.msra.mxu0 0.0
  %159 = vmatpush.msra.mxu0 0.0
  %160 = vmatpush.msra.mxu0 0.0
  %161 = vmatpush.msra.mxu0 0.0
  %162 = vmatpush.msra.mxu0 0.0
  %163 = vmatpush.msra.mxu0 0.0
  %164 = vmatpush.msra.mxu0 0.0
  %165 = vmatpush.msra.mxu0 0.0
  %166 = vmatpush.msra.mxu0 0.0
  %167 = vmatpush.msra.mxu0 0.0
  %168 = vmatpush.msra.mxu0 0.0
  %169 = vmatpush.msra.mxu0 0.0
  %170 = vmatpush.msra.mxu0 0.0
  %171 = vmatpush.msra.mxu0 %v152
  %172 = vmatmul.f32.gmra.mxu0 %v148
  %v173 = vpop.f32.mrf.mxu0
  %v174 = vadd.f32 0.0, %v173
  %175 = vmatmul.f32.gmra.mxu0 %v150
  %v176 = vpop.f32.mrf.mxu0
  %v177 = vadd.f32 0.0, %v176
  %178 = vdwg.mxu0
  %179 = vmatpush.msra.mxu0 0.0
  %180 = vmatpush.msra.mxu0 0.0
  %181 = vmatpush.msra.mxu0 0.0
  %182 = vmatpush.msra.mxu0 0.0
  %183 = vmatpush.msra.mxu0 0.0
  %184 = vmatpush.msra.mxu0 0.0
  %185 = vmatpush.msra.mxu0 0.0
  %186 = vmatpush.msra.mxu0 0.0
  %187 = vmatpush.msra.mxu0 0.0
  %188 = vmatpush.msra.mxu0 0.0
  %189 = vmatpush.msra.mxu0 0.0
  %190 = vmatpush.msra.mxu0 0.0
  %191 = vmatpush.msra.mxu0 0.0
  %192 = vmatpush.msra.mxu0 0.0
  %193 = vmatpush.msra.mxu0 0.0
  %194 = vmatpush.msra.mxu0 %v154
  %195 = vmatmul.f32.gmra.mxu0 %v148
  %v196 = vpop.f32.mrf.mxu0
  %v197 = vadd.f32 0.0, %v196
  %198 = vmatmul.f32.gmra.mxu0 %v150
  %v199 = vpop.f32.mrf.mxu0
  %v200 = vadd.f32 0.0, %v199
  %201 = vdwg.mxu0
  %v206 = vrot.slane %v197, 6
  %v207 = vrot.slane %v200, 6
  %vm208 = vcmask 1041408
  %v209 = vsel %vm208, %v174, %v206
  %vm210 = vcmask 1043458
  %v211 = vsel %vm210, %v174, %v206
  %v212 = vrot.slane %v211, 2
  %vm213 = vcmask 1045508
  %v214 = vsel %vm213, %v174, %v206
  %v215 = vrot.slane %v214, 4
  %vm216 = vcmask 1045504
  %v217 = vsel %vm216, %v206, %v174
  %v218 = vrot.slane %v217, 6
  %v219 = vsel %vm208, %v177, %v207
  %v220 = vsel %vm210, %v177, %v207
  %v221 = vrot.slane %v220, 2
  %v222 = vsel %vm213, %v177, %v207
  %v223 = vrot.slane %v222, 4
  %v224 = vpack.c.bf16 %v112, %v112
  %v225 = vld [vmem:[%s3] sm:$0xf]
  %v226 = vld [vmem:[%s3 + $0x4] sm:$0xf]
  %v227 = vld [vmem:[%s3 + $0x8] sm:$0xf]
  %v228 = vld [vmem:[%s3 + $0xc] sm:$0xf]
  %v229 = vld [vmem:[%s3 + $0x10] sm:$0xf]
  %v230 = vld [vmem:[%s3 + $0x14] sm:$0xf]
  %v231 = vld [vmem:[%s3 + $0x18] sm:$0xf]
  %v232 = vld [vmem:[%s3 + $0x1c] sm:$0xf]
  %v233 = vld [vmem:[%s4] sm:$0x1]
  %v235 = vperm.slane %v233, 0
  %v245 = vunpack.c.l.b16 %v225
  %v246 = vunpack.c.l.b16 %v226
  %v247 = vunpack.c.l.b16 %v227
  %v248 = vunpack.c.l.b16 %v228
  %v249 = vunpack.c.l.b16 %v229
  %v250 = vunpack.c.l.b16 %v230
  %v251 = vunpack.c.l.b16 %v231
  %v252 = vunpack.c.l.b16 %v232
  %v253 = vpack.c.b16 %v246, %v245
  %v254 = vpack.c.b16 %v248, %v247
  %v255 = vpack.c.b16 %v250, %v249
  %v256 = vpack.c.b16 %v252, %v251
  %vm261 = vcmask 523264
  %v263 = vsel %vm261, %v224, 0
  %265 = vmatpush.bf16.msra.mxu0 0
  %266 = vmatpush.bf16.msra.mxu0 0
  %267 = vmatpush.bf16.msra.mxu0 0
  %268 = vmatpush.bf16.msra.mxu0 0
  %269 = vmatpush.bf16.msra.mxu0 %v256
  %270 = vmatpush.bf16.msra.mxu0 %v255
  %271 = vmatpush.bf16.msra.mxu0 %v254
  %272 = vmatpush.bf16.msra.mxu0 %v253
  %273 = vmatmul.bf16.gmra.mxu0 %v263
  %v274 = vpop.f32.mrf.mxu0
  %v275 = vadd.f32 %v235, %v274
  %v276 = vpop.f32.mrf.mxu0
  %277 = vdwg.mxu0
  %v278 = vmax.f32 %v275, 0.0
  %v279 = vpack.c.bf16 %v278, %v278
  %v280 = vld [vmem:[%s5] sm:$0xf]
  %v281 = vld [vmem:[%s5 + $0x4] sm:$0xf]
  %v282 = vld [vmem:[%s5 + $0x8] sm:$0xf]
  %v283 = vld [vmem:[%s5 + $0xc] sm:$0xf]
  %v284 = vld [vmem:[%s5 + $0x10] sm:$0xf]
  %v285 = vld [vmem:[%s5 + $0x14] sm:$0xf]
  %v286 = vld [vmem:[%s5 + $0x18] sm:$0xf]
  %v287 = vld [vmem:[%s5 + $0x1c] sm:$0xf]
  %v288 = vld [vmem:[%s6] sm:$0x1]
  %v290 = vperm.slane %v288, 0
  %v300 = vunpack.c.l.b16 %v280
  %v301 = vunpack.c.l.b16 %v281
  %v302 = vunpack.c.l.b16 %v282
  %v303 = vunpack.c.l.b16 %v283
  %v304 = vunpack.c.l.b16 %v284
  %v305 = vunpack.c.l.b16 %v285
  %v306 = vunpack.c.l.b16 %v286
  %v307 = vunpack.c.l.b16 %v287
  %v308 = vpack.c.b16 %v301, %v300
  %v309 = vpack.c.b16 %v303, %v302
  %v310 = vpack.c.b16 %v305, %v304
  %v311 = vpack.c.b16 %v307, %v306
  %v317 = vsel %vm261, %v279, 0
  %319 = vmatpush.bf16.msra.mxu0 0
  %320 = vmatpush.bf16.msra.mxu0 0
  %321 = vmatpush.bf16.msra.mxu0 0
  %322 = vmatpush.bf16.msra.mxu0 0
  %323 = vmatpush.bf16.msra.mxu0 %v311
  %324 = vmatpush.bf16.msra.mxu0 %v310
  %325 = vmatpush.bf16.msra.mxu0 %v309
  %326 = vmatpush.bf16.msra.mxu0 %v308
  %327 = vmatmul.bf16.gmra.mxu0 %v317
  %v328 = vpop.f32.mrf.mxu0
  %v329 = vadd.f32 %v290, %v328
  %v330 = vpop.f32.mrf.mxu0
  %331 = vdwg.mxu0
  %v332 = vmax.f32 %v329, 0.0
  %v333 = vpack.c.bf16 %v332, %v332
  %v334 = vld [vmem:[%s7] sm:$0xf]
  %v335 = vld [vmem:[%s7 + $0x4] sm:$0xf]
  %v336 = vld [vmem:[%s7 + $0x8] sm:$0xf]
  %v337 = vld [vmem:[%s7 + $0xc] sm:$0xf]
  %v338 = vld [vmem:[%s7 + $0x10] sm:$0xf]
  %v339 = vld [vmem:[%s7 + $0x14] sm:$0xf]
  %v340 = vld [vmem:[%s7 + $0x18] sm:$0xf]
  %v341 = vld [vmem:[%s7 + $0x1c] sm:$0xf]
  %v342 = vld [vmem:[%s8] sm:$0x1]
  %v344 = vperm.slane %v342, 0
  %v354 = vunpack.c.l.b16 %v334
  %v355 = vunpack.c.l.b16 %v335
  %v356 = vunpack.c.l.b16 %v336
  %v357 = vunpack.c.l.b16 %v337
  %v358 = vunpack.c.l.b16 %v338
  %v359 = vunpack.c.l.b16 %v339
  %v360 = vunpack.c.l.b16 %v340
  %v361 = vunpack.c.l.b16 %v341
  %v362 = vpack.c.b16 %v355, %v354
  %v363 = vpack.c.b16 %v357, %v356
  %v364 = vpack.c.b16 %v359, %v358
  %v365 = vpack.c.b16 %v361, %v360
  %v371 = vsel %vm261, %v333, 0
  %373 = vmatpush.bf16.msra.mxu0 0
  %374 = vmatpush.bf16.msra.mxu0 0
  %375 = vmatpush.bf16.msra.mxu0 0
  %376 = vmatpush.bf16.msra.mxu0 0
  %377 = vmatpush.bf16.msra.mxu0 %v365
  %378 = vmatpush.bf16.msra.mxu0 %v364
  %379 = vmatpush.bf16.msra.mxu0 %v363
  %380 = vmatpush.bf16.msra.mxu0 %v362
  %381 = vmatmul.bf16.gmra.mxu0 %v371
  %v382 = vpop.f32.mrf.mxu0
  %v383 = vadd.f32 %v344, %v382
  %v384 = vpop.f32.mrf.mxu0
  %385 = vdwg.mxu0
  %v386 = vmax.f32 %v383, 0.0
  %v387 = vpack.c.bf16 %v386, %v386
  %v388 = vld [vmem:[%s9] sm:$0xf]
  %v389 = vld [vmem:[%s9 + $0x4] sm:$0xf]
  %v390 = vld [vmem:[%s9 + $0x8] sm:$0xf]
  %v391 = vld [vmem:[%s9 + $0xc] sm:$0xf]
  %v392 = vld [vmem:[%s9 + $0x10] sm:$0xf]
  %v393 = vld [vmem:[%s9 + $0x14] sm:$0xf]
  %v394 = vld [vmem:[%s9 + $0x18] sm:$0xf]
  %v395 = vld [vmem:[%s9 + $0x1c] sm:$0xf]
  %v396 = vld [vmem:[%s10] sm:$0x1]
  %v398 = vperm.slane %v396, 0
  %v408 = vunpack.c.l.b16 %v388
  %v409 = vunpack.c.l.b16 %v389
  %v410 = vunpack.c.l.b16 %v390
  %v411 = vunpack.c.l.b16 %v391
  %v412 = vunpack.c.l.b16 %v392
  %v413 = vunpack.c.l.b16 %v393
  %v414 = vunpack.c.l.b16 %v394
  %v415 = vunpack.c.l.b16 %v395
  %v416 = vpack.c.b16 %v409, %v408
  %v417 = vpack.c.b16 %v411, %v410
  %v418 = vpack.c.b16 %v413, %v412
  %v419 = vpack.c.b16 %v415, %v414
  %v425 = vsel %vm261, %v387, 0
  %427 = vmatpush.bf16.msra.mxu0 0
  %428 = vmatpush.bf16.msra.mxu0 0
  %429 = vmatpush.bf16.msra.mxu0 0
  %430 = vmatpush.bf16.msra.mxu0 0
  %431 = vmatpush.bf16.msra.mxu0 %v419
  %432 = vmatpush.bf16.msra.mxu0 %v418
  %433 = vmatpush.bf16.msra.mxu0 %v417
  %434 = vmatpush.bf16.msra.mxu0 %v416
  %435 = vmatmul.bf16.gmra.mxu0 %v425
  %v436 = vpop.f32.mrf.mxu0
  %v437 = vadd.f32 %v398, %v436
  %v438 = vpop.f32.mrf.mxu0
  %439 = vdwg.mxu0
  %v440 = vmax.f32 %v437, 0.0
  %v441 = vpack.c.bf16 %v440, %v440
  %v442 = vld [vmem:[%s11] sm:$0xff]
  %v443 = vld [vmem:[%s11 + $0x8] sm:$0xff]
  %v444 = vld [vmem:[%s11 + $0x10] sm:$0xff]
  %v445 = vld [vmem:[%s11 + $0x18] sm:$0xff]
  %v446 = vld [vmem:[%s11 + $0x20] sm:$0xff]
  %v447 = vld [vmem:[%s11 + $0x28] sm:$0xff]
  %v448 = vld [vmem:[%s11 + $0x30] sm:$0xff]
  %v449 = vld [vmem:[%s11 + $0x38] sm:$0xff]
  %v450 = vld [vmem:[%s12] sm:$0x3]
  %v452 = vperm.slane %v450, 0
  %v453 = vperm.slane %v450, 1
  %v464 = vunpack.c.l.b16 %v442
  %v465 = vunpack.c.h.b16 %v442
  %v466 = vunpack.c.l.b16 %v443
  %v467 = vunpack.c.h.b16 %v443
  %v468 = vunpack.c.l.b16 %v444
  %v469 = vunpack.c.h.b16 %v444
  %v470 = vunpack.c.l.b16 %v445
  %v471 = vunpack.c.h.b16 %v445
  %v472 = vunpack.c.l.b16 %v446
  %v473 = vunpack.c.h.b16 %v446
  %v474 = vunpack.c.l.b16 %v447
  %v475 = vunpack.c.h.b16 %v447
  %v476 = vunpack.c.l.b16 %v448
  %v477 = vunpack.c.h.b16 %v448
  %v478 = vunpack.c.l.b16 %v449
  %v479 = vunpack.c.h.b16 %v449
  %v480 = vpack.c.b16 %v466, %v464
  %v481 = vpack.c.b16 %v467, %v465
  %v482 = vpack.c.b16 %v470, %v468
  %v483 = vpack.c.b16 %v471, %v469
  %v484 = vpack.c.b16 %v474, %v472
  %v485 = vpack.c.b16 %v475, %v473
  %v486 = vpack.c.b16 %v478, %v476
  %v487 = vpack.c.b16 %v479, %v477
  %v497 = vsel %vm261, %v441, 0
  %499 = vmatpush.bf16.msra.mxu0 0
  %500 = vmatpush.bf16.msra.mxu0 0
  %501 = vmatpush.bf16.msra.mxu0 0
  %502 = vmatpush.bf16.msra.mxu0 0
  %503 = vmatpush.bf16.msra.mxu0 %v486
  %504 = vmatpush.bf16.msra.mxu0 %v484
  %505 = vmatpush.bf16.msra.mxu0 %v482
  %506 = vmatpush.bf16.msra.mxu0 %v480
  %507 = vmatmul.bf16.gmra.mxu0 %v497
  %v508 = vpop.f32.mrf.mxu0
  %v509 = vadd.f32 %v452, %v508
  %v510 = vpop.f32.mrf.mxu0
  %511 = vdwg.mxu0
  %512 = vmatpush.bf16.msra.mxu0 0
  %513 = vmatpush.bf16.msra.mxu0 0
  %514 = vmatpush.bf16.msra.mxu0 0
  %515 = vmatpush.bf16.msra.mxu0 0
  %516 = vmatpush.bf16.msra.mxu0 %v487
  %517 = vmatpush.bf16.msra.mxu0 %v485
  %518 = vmatpush.bf16.msra.mxu0 %v483
  %519 = vmatpush.bf16.msra.mxu0 %v481
  %520 = vmatmul.bf16.gmra.mxu0 %v497
  %v521 = vpop.f32.mrf.mxu0
  %v522 = vadd.f32 %v453, %v521
  %v523 = vpop.f32.mrf.mxu0
  %524 = vdwg.mxu0
  %525 = vst [vmem:[#allocation1] ss:$4 sm:$0xff] %v209
  %v526 = vld.sshfl [vmem:[#allocation1] sm:$0xff pattern:$0x73625140]
  %v527 = vld.sshfl [vmem:[#allocation1 + $0x8] sm:$0xff pattern:$0x73625140]
  %v530 = vmul.f32 %v509, %v526
  %v531 = vmul.f32 %v522, %v527
  %v532 = vpack.c.bf16 %v530, %v530
  %v533 = vpack.c.bf16 %v531, %v531
  %v534 = vld [vmem:[%s14] sm:$0xf]
  %v535 = vld [vmem:[%s14 + $0x4] sm:$0xf]
  %v536 = vld [vmem:[%s14 + $0x8] sm:$0xf]
  %v537 = vld [vmem:[%s14 + $0xc] sm:$0xf]
  %v538 = vld [vmem:[%s14 + $0x10] sm:$0xf]
  %v539 = vld [vmem:[%s14 + $0x14] sm:$0xf]
  %v540 = vld [vmem:[%s14 + $0x18] sm:$0xf]
  %v541 = vld [vmem:[%s14 + $0x1c] sm:$0xf]
  %v542 = vld [vmem:[%s14 + $0x20] sm:$0xf]
  %v543 = vld [vmem:[%s14 + $0x24] sm:$0xf]
  %v544 = vld [vmem:[%s14 + $0x28] sm:$0xf]
  %v545 = vld [vmem:[%s14 + $0x2c] sm:$0xf]
  %v546 = vld [vmem:[%s14 + $0x30] sm:$0xf]
  %v547 = vld [vmem:[%s14 + $0x34] sm:$0xf]
  %v548 = vld [vmem:[%s14 + $0x38] sm:$0xf]
  %v549 = vld [vmem:[%s14 + $0x3c] sm:$0xf]
  %v550 = vld [vmem:[%s14 + $0x40] sm:$0xf]
  %v551 = vld [vmem:[%s14 + $0x44] sm:$0xf]
  %v552 = vld [vmem:[%s14 + $0x48] sm:$0xf]
  %v553 = vld [vmem:[%s14 + $0x4c] sm:$0xf]
  %v554 = vld [vmem:[%s14 + $0x50] sm:$0xf]
  %v555 = vld [vmem:[%s14 + $0x54] sm:$0xf]
  %v556 = vld [vmem:[%s14 + $0x58] sm:$0xf]
  %v557 = vld [vmem:[%s14 + $0x5c] sm:$0xf]
  %v558 = vld [vmem:[%s14 + $0x60] sm:$0xf]
  %v559 = vld [vmem:[%s14 + $0x64] sm:$0xf]
  %v560 = vld [vmem:[%s14 + $0x68] sm:$0xf]
  %v561 = vld [vmem:[%s14 + $0x6c] sm:$0xf]
  %v562 = vld [vmem:[%s14 + $0x70] sm:$0xf]
  %v563 = vld [vmem:[%s14 + $0x74] sm:$0xf]
  %v564 = vld [vmem:[%s14 + $0x78] sm:$0xf]
  %v565 = vld [vmem:[%s14 + $0x7c] sm:$0xf]
  %v598 = vunpack.c.l.b16 %v534
  %v599 = vunpack.c.l.b16 %v535
  %v600 = vunpack.c.l.b16 %v536
  %v601 = vunpack.c.l.b16 %v537
  %v602 = vunpack.c.l.b16 %v538
  %v603 = vunpack.c.l.b16 %v539
  %v604 = vunpack.c.l.b16 %v540
  %v605 = vunpack.c.l.b16 %v541
  %v606 = vunpack.c.l.b16 %v542
  %v607 = vunpack.c.l.b16 %v543
  %v608 = vunpack.c.l.b16 %v544
  %v609 = vunpack.c.l.b16 %v545
  %v610 = vunpack.c.l.b16 %v546
  %v611 = vunpack.c.l.b16 %v547
  %v612 = vunpack.c.l.b16 %v548
  %v613 = vunpack.c.l.b16 %v549
  %v614 = vunpack.c.l.b16 %v550
  %v615 = vunpack.c.l.b16 %v551
  %v616 = vunpack.c.l.b16 %v552
  %v617 = vunpack.c.l.b16 %v553
  %v618 = vunpack.c.l.b16 %v554
  %v619 = vunpack.c.l.b16 %v555
  %v620 = vunpack.c.l.b16 %v556
  %v621 = vunpack.c.l.b16 %v557
  %v622 = vunpack.c.l.b16 %v558
  %v623 = vunpack.c.l.b16 %v559
  %v624 = vunpack.c.l.b16 %v560
  %v625 = vunpack.c.l.b16 %v561
  %v626 = vunpack.c.l.b16 %v562
  %v627 = vunpack.c.l.b16 %v563
  %v628 = vunpack.c.l.b16 %v564
  %v629 = vunpack.c.l.b16 %v565
  %v630 = vpack.c.b16 %v599, %v598
  %v631 = vpack.c.b16 %v601, %v600
  %v632 = vpack.c.b16 %v603, %v602
  %v633 = vpack.c.b16 %v605, %v604
  %v634 = vpack.c.b16 %v607, %v606
  %v635 = vpack.c.b16 %v609, %v608
  %v636 = vpack.c.b16 %v611, %v610
  %v637 = vpack.c.b16 %v613, %v612
  %v638 = vpack.c.b16 %v615, %v614
  %v639 = vpack.c.b16 %v617, %v616
  %v640 = vpack.c.b16 %v619, %v618
  %v641 = vpack.c.b16 %v621, %v620
  %v642 = vpack.c.b16 %v623, %v622
  %v643 = vpack.c.b16 %v625, %v624
  %v644 = vpack.c.b16 %v627, %v626
  %v645 = vpack.c.b16 %v629, %v628
  %662 = vmatpush.bf16.msra.mxu0 %v637
  %663 = vmatpush.bf16.msra.mxu0 %v636
  %664 = vmatpush.bf16.msra.mxu0 %v635
  %665 = vmatpush.bf16.msra.mxu0 %v634
  %666 = vmatpush.bf16.msra.mxu0 %v633
  %667 = vmatpush.bf16.msra.mxu0 %v632
  %668 = vmatpush.bf16.msra.mxu0 %v631
  %669 = vmatpush.bf16.msra.mxu0 %v630
  %670 = vmatmul.bf16.gmra.mxu0 %v532
  %v671 = vpop.f32.mrf.mxu0
  %v672 = vadd.f32 0.0, %v671
  %v673 = vpop.f32.mrf.mxu0
  %674 = vdwg.mxu0
  %675 = vmatpush.bf16.msra.mxu0 %v645
  %676 = vmatpush.bf16.msra.mxu0 %v644
  %677 = vmatpush.bf16.msra.mxu0 %v643
  %678 = vmatpush.bf16.msra.mxu0 %v642
  %679 = vmatpush.bf16.msra.mxu0 %v641
  %680 = vmatpush.bf16.msra.mxu0 %v640
  %681 = vmatpush.bf16.msra.mxu0 %v639
  %682 = vmatpush.bf16.msra.mxu0 %v638
  %683 = vmatmul.bf16.gmra.mxu0 %v533
  %v684 = vpop.f32.mrf.mxu0
  %v685 = vadd.f32 %v672, %v684
  %v686 = vpop.f32.mrf.mxu0
  %687 = vdwg.mxu0
  %v688 = vadd.f32 %v112, %v685
  %v689 = vpack.c.bf16 %v688, %v688
  %v691 = vsel %vm261, %v689, 0
  %693 = vmatpush.bf16.msra.mxu0 0
  %694 = vmatpush.bf16.msra.mxu0 0
  %695 = vmatpush.bf16.msra.mxu0 0
  %696 = vmatpush.bf16.msra.mxu0 0
  %697 = vmatpush.bf16.msra.mxu0 %v256
  %698 = vmatpush.bf16.msra.mxu0 %v255
  %699 = vmatpush.bf16.msra.mxu0 %v254
  %700 = vmatpush.bf16.msra.mxu0 %v253
  %701 = vmatmul.bf16.gmra.mxu0 %v691
  %v702 = vpop.f32.mrf.mxu0
  %v703 = vadd.f32 %v235, %v702
  %v704 = vpop.f32.mrf.mxu0
  %705 = vdwg.mxu0
  %v706 = vmax.f32 %v703, 0.0
  %v707 = vpack.c.bf16 %v706, %v706
  %v709 = vsel %vm261, %v707, 0
  %711 = vmatpush.bf16.msra.mxu0 0
  %712 = vmatpush.bf16.msra.mxu0 0
  %713 = vmatpush.bf16.msra.mxu0 0
  %714 = vmatpush.bf16.msra.mxu0 0
  %715 = vmatpush.bf16.msra.mxu0 %v311
  %716 = vmatpush.bf16.msra.mxu0 %v310
  %717 = vmatpush.bf16.msra.mxu0 %v309
  %718 = vmatpush.bf16.msra.mxu0 %v308
  %719 = vmatmul.bf16.gmra.mxu0 %v709
  %v720 = vpop.f32.mrf.mxu0
  %v721 = vadd.f32 %v290, %v720
  %v722 = vpop.f32.mrf.mxu0
  %723 = vdwg.mxu0
  %v724 = vmax.f32 %v721, 0.0
  %v725 = vpack.c.bf16 %v724, %v724
  %v727 = vsel %vm261, %v725, 0
  %729 = vmatpush.bf16.msra.mxu0 0
  %730 = vmatpush.bf16.msra.mxu0 0
  %731 = vmatpush.bf16.msra.mxu0 0
  %732 = vmatpush.bf16.msra.mxu0 0
  %733 = vmatpush.bf16.msra.mxu0 %v365
  %734 = vmatpush.bf16.msra.mxu0 %v364
  %735 = vmatpush.bf16.msra.mxu0 %v363
  %736 = vmatpush.bf16.msra.mxu0 %v362
  %737 = vmatmul.bf16.gmra.mxu0 %v727
  %v738 = vpop.f32.mrf.mxu0
  %v739 = vadd.f32 %v344, %v738
  %v740 = vpop.f32.mrf.mxu0
  %741 = vdwg.mxu0
  %v742 = vmax.f32 %v739, 0.0
  %v743 = vpack.c.bf16 %v742, %v742
  %v745 = vsel %vm261, %v743, 0
  %747 = vmatpush.bf16.msra.mxu0 0
  %748 = vmatpush.bf16.msra.mxu0 0
  %749 = vmatpush.bf16.msra.mxu0 0
  %750 = vmatpush.bf16.msra.mxu0 0
  %751 = vmatpush.bf16.msra.mxu0 %v419
  %752 = vmatpush.bf16.msra.mxu0 %v418
  %753 = vmatpush.bf16.msra.mxu0 %v417
  %754 = vmatpush.bf16.msra.mxu0 %v416
  %755 = vmatmul.bf16.gmra.mxu0 %v745
  %v756 = vpop.f32.mrf.mxu0
  %v757 = vadd.f32 %v398, %v756
  %v758 = vpop.f32.mrf.mxu0
  %759 = vdwg.mxu0
  %v760 = vmax.f32 %v757, 0.0
  %v761 = vpack.c.bf16 %v760, %v760
  %v763 = vsel %vm261, %v761, 0
  %765 = vmatpush.bf16.msra.mxu0 0
  %766 = vmatpush.bf16.msra.mxu0 0
  %767 = vmatpush.bf16.msra.mxu0 0
  %768 = vmatpush.bf16.msra.mxu0 0
  %769 = vmatpush.bf16.msra.mxu0 %v486
  %770 = vmatpush.bf16.msra.mxu0 %v484
  %771 = vmatpush.bf16.msra.mxu0 %v482
  %772 = vmatpush.bf16.msra.mxu0 %v480
  %773 = vmatmul.bf16.gmra.mxu0 %v763
  %v774 = vpop.f32.mrf.mxu0
  %v775 = vadd.f32 %v452, %v774
  %v776 = vpop.f32.mrf.mxu0
  %777 = vdwg.mxu0
  %778 = vmatpush.bf16.msra.mxu0 0
  %779 = vmatpush.bf16.msra.mxu0 0
  %780 = vmatpush.bf16.msra.mxu0 0
  %781 = vmatpush.bf16.msra.mxu0 0
  %782 = vmatpush.bf16.msra.mxu0 %v487
  %783 = vmatpush.bf16.msra.mxu0 %v485
  %784 = vmatpush.bf16.msra.mxu0 %v483
  %785 = vmatpush.bf16.msra.mxu0 %v481
  %786 = vmatmul.bf16.gmra.mxu0 %v763
  %v787 = vpop.f32.mrf.mxu0
  %v788 = vadd.f32 %v453, %v787
  %v789 = vpop.f32.mrf.mxu0
  %790 = vdwg.mxu0
  %791 = vst [vmem:[#allocation1] ss:$4 sm:$0xff] %v212
  %v792 = vld.sshfl [vmem:[#allocation1] sm:$0xff pattern:$0x73625140]
  %v793 = vld.sshfl [vmem:[#allocation1 + $0x8] sm:$0xff pattern:$0x73625140]
  %v796 = vmul.f32 %v775, %v792
  %v797 = vmul.f32 %v788, %v793
  %v798 = vpack.c.bf16 %v796, %v796
  %v799 = vpack.c.bf16 %v797, %v797
  %800 = vmatpush.bf16.msra.mxu0 %v637
  %801 = vmatpush.bf16.msra.mxu0 %v636
  %802 = vmatpush.bf16.msra.mxu0 %v635
  %803 = vmatpush.bf16.msra.mxu0 %v634
  %804 = vmatpush.bf16.msra.mxu0 %v633
  %805 = vmatpush.bf16.msra.mxu0 %v632
  %806 = vmatpush.bf16.msra.mxu0 %v631
  %807 = vmatpush.bf16.msra.mxu0 %v630
  %808 = vmatmul.bf16.gmra.mxu0 %v798
  %v809 = vpop.f32.mrf.mxu0
  %v810 = vadd.f32 0.0, %v809
  %v811 = vpop.f32.mrf.mxu0
  %812 = vdwg.mxu0
  %813 = vmatpush.bf16.msra.mxu0 %v645
  %814 = vmatpush.bf16.msra.mxu0 %v644
  %815 = vmatpush.bf16.msra.mxu0 %v643
  %816 = vmatpush.bf16.msra.mxu0 %v642
  %817 = vmatpush.bf16.msra.mxu0 %v641
  %818 = vmatpush.bf16.msra.mxu0 %v640
  %819 = vmatpush.bf16.msra.mxu0 %v639
  %820 = vmatpush.bf16.msra.mxu0 %v638
  %821 = vmatmul.bf16.gmra.mxu0 %v799
  %v822 = vpop.f32.mrf.mxu0
  %v823 = vadd.f32 %v810, %v822
  %v824 = vpop.f32.mrf.mxu0
  %825 = vdwg.mxu0
  %v826 = vadd.f32 %v688, %v823
  %v827 = vpack.c.bf16 %v826, %v826
  %v829 = vsel %vm261, %v827, 0
  %831 = vmatpush.bf16.msra.mxu0 0
  %832 = vmatpush.bf16.msra.mxu0 0
  %833 = vmatpush.bf16.msra.mxu0 0
  %834 = vmatpush.bf16.msra.mxu0 0
  %835 = vmatpush.bf16.msra.mxu0 %v256
  %836 = vmatpush.bf16.msra.mxu0 %v255
  %837 = vmatpush.bf16.msra.mxu0 %v254
  %838 = vmatpush.bf16.msra.mxu0 %v253
  %839 = vmatmul.bf16.gmra.mxu0 %v829
  %v840 = vpop.f32.mrf.mxu0
  %v841 = vadd.f32 %v235, %v840
  %v842 = vpop.f32.mrf.mxu0
  %843 = vdwg.mxu0
  %v844 = vmax.f32 %v841, 0.0
  %v845 = vpack.c.bf16 %v844, %v844
  %v847 = vsel %vm261, %v845, 0
  %849 = vmatpush.bf16.msra.mxu0 0
  %850 = vmatpush.bf16.msra.mxu0 0
  %851 = vmatpush.bf16.msra.mxu0 0
  %852 = vmatpush.bf16.msra.mxu0 0
  %853 = vmatpush.bf16.msra.mxu0 %v311
  %854 = vmatpush.bf16.msra.mxu0 %v310
  %855 = vmatpush.bf16.msra.mxu0 %v309
  %856 = vmatpush.bf16.msra.mxu0 %v308
  %857 = vmatmul.bf16.gmra.mxu0 %v847
  %v858 = vpop.f32.mrf.mxu0
  %v859 = vadd.f32 %v290, %v858
  %v860 = vpop.f32.mrf.mxu0
  %861 = vdwg.mxu0
  %v862 = vmax.f32 %v859, 0.0
  %v863 = vpack.c.bf16 %v862, %v862
  %v865 = vsel %vm261, %v863, 0
  %867 = vmatpush.bf16.msra.mxu0 0
  %868 = vmatpush.bf16.msra.mxu0 0
  %869 = vmatpush.bf16.msra.mxu0 0
  %870 = vmatpush.bf16.msra.mxu0 0
  %871 = vmatpush.bf16.msra.mxu0 %v365
  %872 = vmatpush.bf16.msra.mxu0 %v364
  %873 = vmatpush.bf16.msra.mxu0 %v363
  %874 = vmatpush.bf16.msra.mxu0 %v362
  %875 = vmatmul.bf16.gmra.mxu0 %v865
  %v876 = vpop.f32.mrf.mxu0
  %v877 = vadd.f32 %v344, %v876
  %v878 = vpop.f32.mrf.mxu0
  %879 = vdwg.mxu0
  %v880 = vmax.f32 %v877, 0.0
  %v881 = vpack.c.bf16 %v880, %v880
  %v883 = vsel %vm261, %v881, 0
  %885 = vmatpush.bf16.msra.mxu0 0
  %886 = vmatpush.bf16.msra.mxu0 0
  %887 = vmatpush.bf16.msra.mxu0 0
  %888 = vmatpush.bf16.msra.mxu0 0
  %889 = vmatpush.bf16.msra.mxu0 %v419
  %890 = vmatpush.bf16.msra.mxu0 %v418
  %891 = vmatpush.bf16.msra.mxu0 %v417
  %892 = vmatpush.bf16.msra.mxu0 %v416
  %893 = vmatmul.bf16.gmra.mxu0 %v883
  %v894 = vpop.f32.mrf.mxu0
  %v895 = vadd.f32 %v398, %v894
  %v896 = vpop.f32.mrf.mxu0
  %897 = vdwg.mxu0
  %v898 = vmax.f32 %v895, 0.0
  %v899 = vpack.c.bf16 %v898, %v898
  %v901 = vsel %vm261, %v899, 0
  %903 = vmatpush.bf16.msra.mxu0 0
  %904 = vmatpush.bf16.msra.mxu0 0
  %905 = vmatpush.bf16.msra.mxu0 0
  %906 = vmatpush.bf16.msra.mxu0 0
  %907 = vmatpush.bf16.msra.mxu0 %v486
  %908 = vmatpush.bf16.msra.mxu0 %v484
  %909 = vmatpush.bf16.msra.mxu0 %v482
  %910 = vmatpush.bf16.msra.mxu0 %v480
  %911 = vmatmul.bf16.gmra.mxu0 %v901
  %v912 = vpop.f32.mrf.mxu0
  %v913 = vadd.f32 %v452, %v912
  %v914 = vpop.f32.mrf.mxu0
  %915 = vdwg.mxu0
  %916 = vmatpush.bf16.msra.mxu0 0
  %917 = vmatpush.bf16.msra.mxu0 0
  %918 = vmatpush.bf16.msra.mxu0 0
  %919 = vmatpush.bf16.msra.mxu0 0
  %920 = vmatpush.bf16.msra.mxu0 %v487
  %921 = vmatpush.bf16.msra.mxu0 %v485
  %922 = vmatpush.bf16.msra.mxu0 %v483
  %923 = vmatpush.bf16.msra.mxu0 %v481
  %924 = vmatmul.bf16.gmra.mxu0 %v901
  %v925 = vpop.f32.mrf.mxu0
  %v926 = vadd.f32 %v453, %v925
  %v927 = vpop.f32.mrf.mxu0
  %928 = vdwg.mxu0
  %929 = vst [vmem:[#allocation1] ss:$4 sm:$0xff] %v215
  %v930 = vld.sshfl [vmem:[#allocation1] sm:$0xff pattern:$0x73625140]
  %v931 = vld.sshfl [vmem:[#allocation1 + $0x8] sm:$0xff pattern:$0x73625140]
  %v934 = vmul.f32 %v913, %v930
  %v935 = vmul.f32 %v926, %v931
  %v936 = vpack.c.bf16 %v934, %v934
  %v937 = vpack.c.bf16 %v935, %v935
  %938 = vmatpush.bf16.msra.mxu0 %v637
  %939 = vmatpush.bf16.msra.mxu0 %v636
  %940 = vmatpush.bf16.msra.mxu0 %v635
  %941 = vmatpush.bf16.msra.mxu0 %v634
  %942 = vmatpush.bf16.msra.mxu0 %v633
  %943 = vmatpush.bf16.msra.mxu0 %v632
  %944 = vmatpush.bf16.msra.mxu0 %v631
  %945 = vmatpush.bf16.msra.mxu0 %v630
  %946 = vmatmul.bf16.gmra.mxu0 %v936
  %v947 = vpop.f32.mrf.mxu0
  %v948 = vadd.f32 0.0, %v947
  %v949 = vpop.f32.mrf.mxu0
  %950 = vdwg.mxu0
  %951 = vmatpush.bf16.msra.mxu0 %v645
  %952 = vmatpush.bf16.msra.mxu0 %v644
  %953 = vmatpush.bf16.msra.mxu0 %v643
  %954 = vmatpush.bf16.msra.mxu0 %v642
  %955 = vmatpush.bf16.msra.mxu0 %v641
  %956 = vmatpush.bf16.msra.mxu0 %v640
  %957 = vmatpush.bf16.msra.mxu0 %v639
  %958 = vmatpush.bf16.msra.mxu0 %v638
  %959 = vmatmul.bf16.gmra.mxu0 %v937
  %v960 = vpop.f32.mrf.mxu0
  %v961 = vadd.f32 %v948, %v960
  %v962 = vpop.f32.mrf.mxu0
  %963 = vdwg.mxu0
  %v964 = vadd.f32 %v826, %v961
  %v965 = vpack.c.bf16 %v964, %v964
  %v967 = vsel %vm261, %v965, 0
  %969 = vmatpush.bf16.msra.mxu0 0
  %970 = vmatpush.bf16.msra.mxu0 0
  %971 = vmatpush.bf16.msra.mxu0 0
  %972 = vmatpush.bf16.msra.mxu0 0
  %973 = vmatpush.bf16.msra.mxu0 %v256
  %974 = vmatpush.bf16.msra.mxu0 %v255
  %975 = vmatpush.bf16.msra.mxu0 %v254
  %976 = vmatpush.bf16.msra.mxu0 %v253
  %977 = vmatmul.bf16.gmra.mxu0 %v967
  %v978 = vpop.f32.mrf.mxu0
  %v979 = vadd.f32 %v235, %v978
  %v980 = vpop.f32.mrf.mxu0
  %981 = vdwg.mxu0
  %v982 = vmax.f32 %v979, 0.0
  %v983 = vpack.c.bf16 %v982, %v982
  %v985 = vsel %vm261, %v983, 0
  %987 = vmatpush.bf16.msra.mxu0 0
  %988 = vmatpush.bf16.msra.mxu0 0
  %989 = vmatpush.bf16.msra.mxu0 0
  %990 = vmatpush.bf16.msra.mxu0 0
  %991 = vmatpush.bf16.msra.mxu0 %v311
  %992 = vmatpush.bf16.msra.mxu0 %v310
  %993 = vmatpush.bf16.msra.mxu0 %v309
  %994 = vmatpush.bf16.msra.mxu0 %v308
  %995 = vmatmul.bf16.gmra.mxu0 %v985
  %v996 = vpop.f32.mrf.mxu0
  %v997 = vadd.f32 %v290, %v996
  %v998 = vpop.f32.mrf.mxu0
  %999 = vdwg.mxu0
  %v1000 = vmax.f32 %v997, 0.0
  %v1001 = vpack.c.bf16 %v1000, %v1000
  %v1003 = vsel %vm261, %v1001, 0
  %1005 = vmatpush.bf16.msra.mxu0 0
  %1006 = vmatpush.bf16.msra.mxu0 0
  %1007 = vmatpush.bf16.msra.mxu0 0
  %1008 = vmatpush.bf16.msra.mxu0 0
  %1009 = vmatpush.bf16.msra.mxu0 %v365
  %1010 = vmatpush.bf16.msra.mxu0 %v364
  %1011 = vmatpush.bf16.msra.mxu0 %v363
  %1012 = vmatpush.bf16.msra.mxu0 %v362
  %1013 = vmatmul.bf16.gmra.mxu0 %v1003
  %v1014 = vpop.f32.mrf.mxu0
  %v1015 = vadd.f32 %v344, %v1014
  %v1016 = vpop.f32.mrf.mxu0
  %1017 = vdwg.mxu0
  %v1018 = vmax.f32 %v1015, 0.0
  %v1019 = vpack.c.bf16 %v1018, %v1018
  %v1021 = vsel %vm261, %v1019, 0
  %1023 = vmatpush.bf16.msra.mxu0 0
  %1024 = vmatpush.bf16.msra.mxu0 0
  %1025 = vmatpush.bf16.msra.mxu0 0
  %1026 = vmatpush.bf16.msra.mxu0 0
  %1027 = vmatpush.bf16.msra.mxu0 %v419
  %1028 = vmatpush.bf16.msra.mxu0 %v418
  %1029 = vmatpush.bf16.msra.mxu0 %v417
  %1030 = vmatpush.bf16.msra.mxu0 %v416
  %1031 = vmatmul.bf16.gmra.mxu0 %v1021
  %v1032 = vpop.f32.mrf.mxu0
  %v1033 = vadd.f32 %v398, %v1032
  %v1034 = vpop.f32.mrf.mxu0
  %1035 = vdwg.mxu0
  %v1036 = vmax.f32 %v1033, 0.0
  %v1037 = vpack.c.bf16 %v1036, %v1036
  %v1039 = vsel %vm261, %v1037, 0
  %1041 = vmatpush.bf16.msra.mxu0 0
  %1042 = vmatpush.bf16.msra.mxu0 0
  %1043 = vmatpush.bf16.msra.mxu0 0
  %1044 = vmatpush.bf16.msra.mxu0 0
  %1045 = vmatpush.bf16.msra.mxu0 %v486
  %1046 = vmatpush.bf16.msra.mxu0 %v484
  %1047 = vmatpush.bf16.msra.mxu0 %v482
  %1048 = vmatpush.bf16.msra.mxu0 %v480
  %1049 = vmatmul.bf16.gmra.mxu0 %v1039
  %v1050 = vpop.f32.mrf.mxu0
  %v1051 = vadd.f32 %v452, %v1050
  %v1052 = vpop.f32.mrf.mxu0
  %1053 = vdwg.mxu0
  %1054 = vmatpush.bf16.msra.mxu0 0
  %1055 = vmatpush.bf16.msra.mxu0 0
  %1056 = vmatpush.bf16.msra.mxu0 0
  %1057 = vmatpush.bf16.msra.mxu0 0
  %1058 = vmatpush.bf16.msra.mxu0 %v487
  %1059 = vmatpush.bf16.msra.mxu0 %v485
  %1060 = vmatpush.bf16.msra.mxu0 %v483
  %1061 = vmatpush.bf16.msra.mxu0 %v481
  %1062 = vmatmul.bf16.gmra.mxu0 %v1039
  %v1063 = vpop.f32.mrf.mxu0
  %v1064 = vadd.f32 %v453, %v1063
  %v1065 = vpop.f32.mrf.mxu0
  %1066 = vdwg.mxu0
  %1067 = vst [vmem:[#allocation1] ss:$4 sm:$0xff] %v218
  %v1068 = vld.sshfl [vmem:[#allocation1] sm:$0xff pattern:$0x73625140]
  %v1069 = vld.sshfl [vmem:[#allocation1 + $0x8] sm:$0xff pattern:$0x73625140]
  %v1072 = vmul.f32 %v1051, %v1068
  %v1073 = vmul.f32 %v1064, %v1069
  %v1074 = vpack.c.bf16 %v1072, %v1072
  %v1075 = vpack.c.bf16 %v1073, %v1073
  %1076 = vmatpush.bf16.msra.mxu0 %v637
  %1077 = vmatpush.bf16.msra.mxu0 %v636
  %1078 = vmatpush.bf16.msra.mxu0 %v635
  %1079 = vmatpush.bf16.msra.mxu0 %v634
  %1080 = vmatpush.bf16.msra.mxu0 %v633
  %1081 = vmatpush.bf16.msra.mxu0 %v632
  %1082 = vmatpush.bf16.msra.mxu0 %v631
  %1083 = vmatpush.bf16.msra.mxu0 %v630
  %1084 = vmatmul.bf16.gmra.mxu0 %v1074
  %v1085 = vpop.f32.mrf.mxu0
  %v1086 = vadd.f32 0.0, %v1085
  %v1087 = vpop.f32.mrf.mxu0
  %1088 = vdwg.mxu0
  %1089 = vmatpush.bf16.msra.mxu0 %v645
  %1090 = vmatpush.bf16.msra.mxu0 %v644
  %1091 = vmatpush.bf16.msra.mxu0 %v643
  %1092 = vmatpush.bf16.msra.mxu0 %v642
  %1093 = vmatpush.bf16.msra.mxu0 %v641
  %1094 = vmatpush.bf16.msra.mxu0 %v640
  %1095 = vmatpush.bf16.msra.mxu0 %v639
  %1096 = vmatpush.bf16.msra.mxu0 %v638
  %1097 = vmatmul.bf16.gmra.mxu0 %v1075
  %v1098 = vpop.f32.mrf.mxu0
  %v1099 = vadd.f32 %v1086, %v1098
  %v1100 = vpop.f32.mrf.mxu0
  %1101 = vdwg.mxu0
  %v1102 = vadd.f32 %v964, %v1099
  %v1103 = vpack.c.bf16 %v1102, %v1102
  %v1105 = vsel %vm261, %v1103, 0
  %1107 = vmatpush.bf16.msra.mxu0 0
  %1108 = vmatpush.bf16.msra.mxu0 0
  %1109 = vmatpush.bf16.msra.mxu0 0
  %1110 = vmatpush.bf16.msra.mxu0 0
  %1111 = vmatpush.bf16.msra.mxu0 %v256
  %1112 = vmatpush.bf16.msra.mxu0 %v255
  %1113 = vmatpush.bf16.msra.mxu0 %v254
  %1114 = vmatpush.bf16.msra.mxu0 %v253
  %1115 = vmatmul.bf16.gmra.mxu0 %v1105
  %v1116 = vpop.f32.mrf.mxu0
  %v1117 = vadd.f32 %v235, %v1116
  %v1118 = vpop.f32.mrf.mxu0
  %1119 = vdwg.mxu0
  %v1120 = vmax.f32 %v1117, 0.0
  %v1121 = vpack.c.bf16 %v1120, %v1120
  %v1123 = vsel %vm261, %v1121, 0
  %1125 = vmatpush.bf16.msra.mxu0 0
  %1126 = vmatpush.bf16.msra.mxu0 0
  %1127 = vmatpush.bf16.msra.mxu0 0
  %1128 = vmatpush.bf16.msra.mxu0 0
  %1129 = vmatpush.bf16.msra.mxu0 %v311
  %1130 = vmatpush.bf16.msra.mxu0 %v310
  %1131 = vmatpush.bf16.msra.mxu0 %v309
  %1132 = vmatpush.bf16.msra.mxu0 %v308
  %1133 = vmatmul.bf16.gmra.mxu0 %v1123
  %v1134 = vpop.f32.mrf.mxu0
  %v1135 = vadd.f32 %v290, %v1134
  %v1136 = vpop.f32.mrf.mxu0
  %1137 = vdwg.mxu0
  %v1138 = vmax.f32 %v1135, 0.0
  %v1139 = vpack.c.bf16 %v1138, %v1138
  %v1141 = vsel %vm261, %v1139, 0
  %1143 = vmatpush.bf16.msra.mxu0 0
  %1144 = vmatpush.bf16.msra.mxu0 0
  %1145 = vmatpush.bf16.msra.mxu0 0
  %1146 = vmatpush.bf16.msra.mxu0 0
  %1147 = vmatpush.bf16.msra.mxu0 %v365
  %1148 = vmatpush.bf16.msra.mxu0 %v364
  %1149 = vmatpush.bf16.msra.mxu0 %v363
  %1150 = vmatpush.bf16.msra.mxu0 %v362
  %1151 = vmatmul.bf16.gmra.mxu0 %v1141
  %v1152 = vpop.f32.mrf.mxu0
  %v1153 = vadd.f32 %v344, %v1152
  %v1154 = vpop.f32.mrf.mxu0
  %1155 = vdwg.mxu0
  %v1156 = vmax.f32 %v1153, 0.0
  %v1157 = vpack.c.bf16 %v1156, %v1156
  %v1159 = vsel %vm261, %v1157, 0
  %1161 = vmatpush.bf16.msra.mxu0 0
  %1162 = vmatpush.bf16.msra.mxu0 0
  %1163 = vmatpush.bf16.msra.mxu0 0
  %1164 = vmatpush.bf16.msra.mxu0 0
  %1165 = vmatpush.bf16.msra.mxu0 %v419
  %1166 = vmatpush.bf16.msra.mxu0 %v418
  %1167 = vmatpush.bf16.msra.mxu0 %v417
  %1168 = vmatpush.bf16.msra.mxu0 %v416
  %1169 = vmatmul.bf16.gmra.mxu0 %v1159
  %v1170 = vpop.f32.mrf.mxu0
  %v1171 = vadd.f32 %v398, %v1170
  %v1172 = vpop.f32.mrf.mxu0
  %1173 = vdwg.mxu0
  %v1174 = vmax.f32 %v1171, 0.0
  %v1175 = vpack.c.bf16 %v1174, %v1174
  %v1177 = vsel %vm261, %v1175, 0
  %1179 = vmatpush.bf16.msra.mxu0 0
  %1180 = vmatpush.bf16.msra.mxu0 0
  %1181 = vmatpush.bf16.msra.mxu0 0
  %1182 = vmatpush.bf16.msra.mxu0 0
  %1183 = vmatpush.bf16.msra.mxu0 %v486
  %1184 = vmatpush.bf16.msra.mxu0 %v484
  %1185 = vmatpush.bf16.msra.mxu0 %v482
  %1186 = vmatpush.bf16.msra.mxu0 %v480
  %1187 = vmatmul.bf16.gmra.mxu0 %v1177
  %v1188 = vpop.f32.mrf.mxu0
  %v1189 = vadd.f32 %v452, %v1188
  %v1190 = vpop.f32.mrf.mxu0
  %1191 = vdwg.mxu0
  %1192 = vmatpush.bf16.msra.mxu0 0
  %1193 = vmatpush.bf16.msra.mxu0 0
  %1194 = vmatpush.bf16.msra.mxu0 0
  %1195 = vmatpush.bf16.msra.mxu0 0
  %1196 = vmatpush.bf16.msra.mxu0 %v487
  %1197 = vmatpush.bf16.msra.mxu0 %v485
  %1198 = vmatpush.bf16.msra.mxu0 %v483
  %1199 = vmatpush.bf16.msra.mxu0 %v481
  %1200 = vmatmul.bf16.gmra.mxu0 %v1177
  %v1201 = vpop.f32.mrf.mxu0
  %v1202 = vadd.f32 %v453, %v1201
  %v1203 = vpop.f32.mrf.mxu0
  %1204 = vdwg.mxu0
  %1205 = vst [vmem:[#allocation1] ss:$4 sm:$0xff] %v219
  %v1206 = vld.sshfl [vmem:[#allocation1] sm:$0xff pattern:$0x73625140]
  %v1207 = vld.sshfl [vmem:[#allocation1 + $0x8] sm:$0xff pattern:$0x73625140]
  %v1210 = vmul.f32 %v1189, %v1206
  %v1211 = vmul.f32 %v1202, %v1207
  %v1212 = vpack.c.bf16 %v1210, %v1210
  %v1213 = vpack.c.bf16 %v1211, %v1211
  %1214 = vmatpush.bf16.msra.mxu0 %v637
  %1215 = vmatpush.bf16.msra.mxu0 %v636
  %1216 = vmatpush.bf16.msra.mxu0 %v635
  %1217 = vmatpush.bf16.msra.mxu0 %v634
  %1218 = vmatpush.bf16.msra.mxu0 %v633
  %1219 = vmatpush.bf16.msra.mxu0 %v632
  %1220 = vmatpush.bf16.msra.mxu0 %v631
  %1221 = vmatpush.bf16.msra.mxu0 %v630
  %1222 = vmatmul.bf16.gmra.mxu0 %v1212
  %v1223 = vpop.f32.mrf.mxu0
  %v1224 = vadd.f32 0.0, %v1223
  %v1225 = vpop.f32.mrf.mxu0
  %1226 = vdwg.mxu0
  %1227 = vmatpush.bf16.msra.mxu0 %v645
  %1228 = vmatpush.bf16.msra.mxu0 %v644
  %1229 = vmatpush.bf16.msra.mxu0 %v643
  %1230 = vmatpush.bf16.msra.mxu0 %v642
  %1231 = vmatpush.bf16.msra.mxu0 %v641
  %1232 = vmatpush.bf16.msra.mxu0 %v640
  %1233 = vmatpush.bf16.msra.mxu0 %v639
  %1234 = vmatpush.bf16.msra.mxu0 %v638
  %1235 = vmatmul.bf16.gmra.mxu0 %v1213
  %v1236 = vpop.f32.mrf.mxu0
  %v1237 = vadd.f32 %v1224, %v1236
  %v1238 = vpop.f32.mrf.mxu0
  %1239 = vdwg.mxu0
  %v1240 = vadd.f32 %v1102, %v1237
  %v1241 = vpack.c.bf16 %v1240, %v1240
  %v1243 = vsel %vm261, %v1241, 0
  %1245 = vmatpush.bf16.msra.mxu0 0
  %1246 = vmatpush.bf16.msra.mxu0 0
  %1247 = vmatpush.bf16.msra.mxu0 0
  %1248 = vmatpush.bf16.msra.mxu0 0
  %1249 = vmatpush.bf16.msra.mxu0 %v256
  %1250 = vmatpush.bf16.msra.mxu0 %v255
  %1251 = vmatpush.bf16.msra.mxu0 %v254
  %1252 = vmatpush.bf16.msra.mxu0 %v253
  %1253 = vmatmul.bf16.gmra.mxu0 %v1243
  %v1254 = vpop.f32.mrf.mxu0
  %v1255 = vadd.f32 %v235, %v1254
  %v1256 = vpop.f32.mrf.mxu0
  %1257 = vdwg.mxu0
  %v1258 = vmax.f32 %v1255, 0.0
  %v1259 = vpack.c.bf16 %v1258, %v1258
  %v1261 = vsel %vm261, %v1259, 0
  %1263 = vmatpush.bf16.msra.mxu0 0
  %1264 = vmatpush.bf16.msra.mxu0 0
  %1265 = vmatpush.bf16.msra.mxu0 0
  %1266 = vmatpush.bf16.msra.mxu0 0
  %1267 = vmatpush.bf16.msra.mxu0 %v311
  %1268 = vmatpush.bf16.msra.mxu0 %v310
  %1269 = vmatpush.bf16.msra.mxu0 %v309
  %1270 = vmatpush.bf16.msra.mxu0 %v308
  %1271 = vmatmul.bf16.gmra.mxu0 %v1261
  %v1272 = vpop.f32.mrf.mxu0
  %v1273 = vadd.f32 %v290, %v1272
  %v1274 = vpop.f32.mrf.mxu0
  %1275 = vdwg.mxu0
  %v1276 = vmax.f32 %v1273, 0.0
  %v1277 = vpack.c.bf16 %v1276, %v1276
  %v1279 = vsel %vm261, %v1277, 0
  %1281 = vmatpush.bf16.msra.mxu0 0
  %1282 = vmatpush.bf16.msra.mxu0 0
  %1283 = vmatpush.bf16.msra.mxu0 0
  %1284 = vmatpush.bf16.msra.mxu0 0
  %1285 = vmatpush.bf16.msra.mxu0 %v365
  %1286 = vmatpush.bf16.msra.mxu0 %v364
  %1287 = vmatpush.bf16.msra.mxu0 %v363
  %1288 = vmatpush.bf16.msra.mxu0 %v362
  %1289 = vmatmul.bf16.gmra.mxu0 %v1279
  %v1290 = vpop.f32.mrf.mxu0
  %v1291 = vadd.f32 %v344, %v1290
  %v1292 = vpop.f32.mrf.mxu0
  %1293 = vdwg.mxu0
  %v1294 = vmax.f32 %v1291, 0.0
  %v1295 = vpack.c.bf16 %v1294, %v1294
  %v1297 = vsel %vm261, %v1295, 0
  %1299 = vmatpush.bf16.msra.mxu0 0
  %1300 = vmatpush.bf16.msra.mxu0 0
  %1301 = vmatpush.bf16.msra.mxu0 0
  %1302 = vmatpush.bf16.msra.mxu0 0
  %1303 = vmatpush.bf16.msra.mxu0 %v419
  %1304 = vmatpush.bf16.msra.mxu0 %v418
  %1305 = vmatpush.bf16.msra.mxu0 %v417
  %1306 = vmatpush.bf16.msra.mxu0 %v416
  %1307 = vmatmul.bf16.gmra.mxu0 %v1297
  %v1308 = vpop.f32.mrf.mxu0
  %v1309 = vadd.f32 %v398, %v1308
  %v1310 = vpop.f32.mrf.mxu0
  %1311 = vdwg.mxu0
  %v1312 = vmax.f32 %v1309, 0.0
  %v1313 = vpack.c.bf16 %v1312, %v1312
  %v1315 = vsel %vm261, %v1313, 0
  %1317 = vmatpush.bf16.msra.mxu0 0
  %1318 = vmatpush.bf16.msra.mxu0 0
  %1319 = vmatpush.bf16.msra.mxu0 0
  %1320 = vmatpush.bf16.msra.mxu0 0
  %1321 = vmatpush.bf16.msra.mxu0 %v486
  %1322 = vmatpush.bf16.msra.mxu0 %v484
  %1323 = vmatpush.bf16.msra.mxu0 %v482
  %1324 = vmatpush.bf16.msra.mxu0 %v480
  %1325 = vmatmul.bf16.gmra.mxu0 %v1315
  %v1326 = vpop.f32.mrf.mxu0
  %v1327 = vadd.f32 %v452, %v1326
  %v1328 = vpop.f32.mrf.mxu0
  %1329 = vdwg.mxu0
  %1330 = vmatpush.bf16.msra.mxu0 0
  %1331 = vmatpush.bf16.msra.mxu0 0
  %1332 = vmatpush.bf16.msra.mxu0 0
  %1333 = vmatpush.bf16.msra.mxu0 0
  %1334 = vmatpush.bf16.msra.mxu0 %v487
  %1335 = vmatpush.bf16.msra.mxu0 %v485
  %1336 = vmatpush.bf16.msra.mxu0 %v483
  %1337 = vmatpush.bf16.msra.mxu0 %v481
  %1338 = vmatmul.bf16.gmra.mxu0 %v1315
  %v1339 = vpop.f32.mrf.mxu0
  %v1340 = vadd.f32 %v453, %v1339
  %v1341 = vpop.f32.mrf.mxu0
  %1342 = vdwg.mxu0
  %1343 = vst [vmem:[#allocation1] ss:$4 sm:$0xff] %v221
  %v1344 = vld.sshfl [vmem:[#allocation1] sm:$0xff pattern:$0x73625140]
  %v1345 = vld.sshfl [vmem:[#allocation1 + $0x8] sm:$0xff pattern:$0x73625140]
  %v1348 = vmul.f32 %v1327, %v1344
  %v1349 = vmul.f32 %v1340, %v1345
  %v1350 = vpack.c.bf16 %v1348, %v1348
  %v1351 = vpack.c.bf16 %v1349, %v1349
  %1352 = vmatpush.bf16.msra.mxu0 %v637
  %1353 = vmatpush.bf16.msra.mxu0 %v636
  %1354 = vmatpush.bf16.msra.mxu0 %v635
  %1355 = vmatpush.bf16.msra.mxu0 %v634
  %1356 = vmatpush.bf16.msra.mxu0 %v633
  %1357 = vmatpush.bf16.msra.mxu0 %v632
  %1358 = vmatpush.bf16.msra.mxu0 %v631
  %1359 = vmatpush.bf16.msra.mxu0 %v630
  %1360 = vmatmul.bf16.gmra.mxu0 %v1350
  %v1361 = vpop.f32.mrf.mxu0
  %v1362 = vadd.f32 0.0, %v1361
  %v1363 = vpop.f32.mrf.mxu0
  %1364 = vdwg.mxu0
  %1365 = vmatpush.bf16.msra.mxu0 %v645
  %1366 = vmatpush.bf16.msra.mxu0 %v644
  %1367 = vmatpush.bf16.msra.mxu0 %v643
  %1368 = vmatpush.bf16.msra.mxu0 %v642
  %1369 = vmatpush.bf16.msra.mxu0 %v641
  %1370 = vmatpush.bf16.msra.mxu0 %v640
  %1371 = vmatpush.bf16.msra.mxu0 %v639
  %1372 = vmatpush.bf16.msra.mxu0 %v638
  %1373 = vmatmul.bf16.gmra.mxu0 %v1351
  %v1374 = vpop.f32.mrf.mxu0
  %v1375 = vadd.f32 %v1362, %v1374
  %v1376 = vpop.f32.mrf.mxu0
  %1377 = vdwg.mxu0
  %v1378 = vadd.f32 %v1240, %v1375
  %v1379 = vpack.c.bf16 %v1378, %v1378
  %v1381 = vsel %vm261, %v1379, 0
  %1383 = vmatpush.bf16.msra.mxu0 0
  %1384 = vmatpush.bf16.msra.mxu0 0
  %1385 = vmatpush.bf16.msra.mxu0 0
  %1386 = vmatpush.bf16.msra.mxu0 0
  %1387 = vmatpush.bf16.msra.mxu0 %v256
  %1388 = vmatpush.bf16.msra.mxu0 %v255
  %1389 = vmatpush.bf16.msra.mxu0 %v254
  %1390 = vmatpush.bf16.msra.mxu0 %v253
  %1391 = vmatmul.bf16.gmra.mxu0 %v1381
  %v1392 = vpop.f32.mrf.mxu0
  %v1393 = vadd.f32 %v235, %v1392
  %v1394 = vpop.f32.mrf.mxu0
  %1395 = vdwg.mxu0
  %v1396 = vmax.f32 %v1393, 0.0
  %v1397 = vpack.c.bf16 %v1396, %v1396
  %v1399 = vsel %vm261, %v1397, 0
  %1401 = vmatpush.bf16.msra.mxu0 0
  %1402 = vmatpush.bf16.msra.mxu0 0
  %1403 = vmatpush.bf16.msra.mxu0 0
  %1404 = vmatpush.bf16.msra.mxu0 0
  %1405 = vmatpush.bf16.msra.mxu0 %v311
  %1406 = vmatpush.bf16.msra.mxu0 %v310
  %1407 = vmatpush.bf16.msra.mxu0 %v309
  %1408 = vmatpush.bf16.msra.mxu0 %v308
  %1409 = vmatmul.bf16.gmra.mxu0 %v1399
  %v1410 = vpop.f32.mrf.mxu0
  %v1411 = vadd.f32 %v290, %v1410
  %v1412 = vpop.f32.mrf.mxu0
  %1413 = vdwg.mxu0
  %v1414 = vmax.f32 %v1411, 0.0
  %v1415 = vpack.c.bf16 %v1414, %v1414
  %v1417 = vsel %vm261, %v1415, 0
  %1419 = vmatpush.bf16.msra.mxu0 0
  %1420 = vmatpush.bf16.msra.mxu0 0
  %1421 = vmatpush.bf16.msra.mxu0 0
  %1422 = vmatpush.bf16.msra.mxu0 0
  %1423 = vmatpush.bf16.msra.mxu0 %v365
  %1424 = vmatpush.bf16.msra.mxu0 %v364
  %1425 = vmatpush.bf16.msra.mxu0 %v363
  %1426 = vmatpush.bf16.msra.mxu0 %v362
  %1427 = vmatmul.bf16.gmra.mxu0 %v1417
  %v1428 = vpop.f32.mrf.mxu0
  %v1429 = vadd.f32 %v344, %v1428
  %v1430 = vpop.f32.mrf.mxu0
  %1431 = vdwg.mxu0
  %v1432 = vmax.f32 %v1429, 0.0
  %v1433 = vpack.c.bf16 %v1432, %v1432
  %v1435 = vsel %vm261, %v1433, 0
  %1437 = vmatpush.bf16.msra.mxu0 0
  %1438 = vmatpush.bf16.msra.mxu0 0
  %1439 = vmatpush.bf16.msra.mxu0 0
  %1440 = vmatpush.bf16.msra.mxu0 0
  %1441 = vmatpush.bf16.msra.mxu0 %v419
  %1442 = vmatpush.bf16.msra.mxu0 %v418
  %1443 = vmatpush.bf16.msra.mxu0 %v417
  %1444 = vmatpush.bf16.msra.mxu0 %v416
  %1445 = vmatmul.bf16.gmra.mxu0 %v1435
  %v1446 = vpop.f32.mrf.mxu0
  %v1447 = vadd.f32 %v398, %v1446
  %v1448 = vpop.f32.mrf.mxu0
  %1449 = vdwg.mxu0
  %v1450 = vmax.f32 %v1447, 0.0
  %v1451 = vpack.c.bf16 %v1450, %v1450
  %v1453 = vsel %vm261, %v1451, 0
  %1455 = vmatpush.bf16.msra.mxu0 0
  %1456 = vmatpush.bf16.msra.mxu0 0
  %1457 = vmatpush.bf16.msra.mxu0 0
  %1458 = vmatpush.bf16.msra.mxu0 0
  %1459 = vmatpush.bf16.msra.mxu0 %v486
  %1460 = vmatpush.bf16.msra.mxu0 %v484
  %1461 = vmatpush.bf16.msra.mxu0 %v482
  %1462 = vmatpush.bf16.msra.mxu0 %v480
  %1463 = vmatmul.bf16.gmra.mxu0 %v1453
  %v1464 = vpop.f32.mrf.mxu0
  %v1465 = vadd.f32 %v452, %v1464
  %v1466 = vpop.f32.mrf.mxu0
  %1467 = vdwg.mxu0
  %1468 = vmatpush.bf16.msra.mxu0 0
  %1469 = vmatpush.bf16.msra.mxu0 0
  %1470 = vmatpush.bf16.msra.mxu0 0
  %1471 = vmatpush.bf16.msra.mxu0 0
  %1472 = vmatpush.bf16.msra.mxu0 %v487
  %1473 = vmatpush.bf16.msra.mxu0 %v485
  %1474 = vmatpush.bf16.msra.mxu0 %v483
  %1475 = vmatpush.bf16.msra.mxu0 %v481
  %1476 = vmatmul.bf16.gmra.mxu0 %v1453
  %v1477 = vpop.f32.mrf.mxu0
  %v1478 = vadd.f32 %v453, %v1477
  %v1479 = vpop.f32.mrf.mxu0
  %1480 = vdwg.mxu0
  %1481 = vst [vmem:[#allocation1] ss:$4 sm:$0xff] %v223
  %v1482 = vld.sshfl [vmem:[#allocation1] sm:$0xff pattern:$0x73625140]
  %v1483 = vld.sshfl [vmem:[#allocation1 + $0x8] sm:$0xff pattern:$0x73625140]
  %v1486 = vmul.f32 %v1465, %v1482
  %v1487 = vmul.f32 %v1478, %v1483
  %v1488 = vpack.c.bf16 %v1486, %v1486
  %v1489 = vpack.c.bf16 %v1487, %v1487
  %1490 = vmatpush.bf16.msra.mxu0 %v637
  %1491 = vmatpush.bf16.msra.mxu0 %v636
  %1492 = vmatpush.bf16.msra.mxu0 %v635
  %1493 = vmatpush.bf16.msra.mxu0 %v634
  %1494 = vmatpush.bf16.msra.mxu0 %v633
  %1495 = vmatpush.bf16.msra.mxu0 %v632
  %1496 = vmatpush.bf16.msra.mxu0 %v631
  %1497 = vmatpush.bf16.msra.mxu0 %v630
  %1498 = vmatmul.bf16.gmra.mxu0 %v1488
  %v1499 = vpop.f32.mrf.mxu0
  %v1500 = vadd.f32 0.0, %v1499
  %v1501 = vpop.f32.mrf.mxu0
  %1502 = vdwg.mxu0
  %1503 = vmatpush.bf16.msra.mxu0 %v645
  %1504 = vmatpush.bf16.msra.mxu0 %v644
  %1505 = vmatpush.bf16.msra.mxu0 %v643
  %1506 = vmatpush.bf16.msra.mxu0 %v642
  %1507 = vmatpush.bf16.msra.mxu0 %v641
  %1508 = vmatpush.bf16.msra.mxu0 %v640
  %1509 = vmatpush.bf16.msra.mxu0 %v639
  %1510 = vmatpush.bf16.msra.mxu0 %v638
  %1511 = vmatmul.bf16.gmra.mxu0 %v1489
  %v1512 = vpop.f32.mrf.mxu0
  %v1513 = vadd.f32 %v1500, %v1512
  %v1514 = vpop.f32.mrf.mxu0
  %1515 = vdwg.mxu0
  %v1516 = vadd.f32 %v1378, %v1513
  %v1518 = vrot.slane %v688, 6
  %v1521 = vrot.slane %v826, 4
  %v1524 = vrot.slane %v964, 2
  %v1527 = vrot.slane %v1240, 6
  %v1530 = vrot.slane %v1378, 4
  %v1533 = vrot.slane %v1516, 2
  %v1535 = vsel %vm208, %v112, %v1518
  %v1536 = vsel %vm90, %v1535, %v1521
  %v1537 = vsel %vm216, %v1536, %v1524
  %v1538 = vsel %vm208, %v1102, %v1527
  %v1539 = vsel %vm90, %v1538, %v1530
  %v1540 = vsel %vm216, %v1539, %v1533
  %v1541 = vpack.c.bf16 %v1540, %v1537
  %v1542 = vld [vmem:[%s15] sm:$0xf]
  %v1543 = vld [vmem:[%s15 + $0x4] sm:$0xf]
  %v1544 = vld [vmem:[%s15 + $0x8] sm:$0xf]
  %v1545 = vld [vmem:[%s15 + $0xc] sm:$0xf]
  %v1546 = vld [vmem:[%s15 + $0x10] sm:$0xf]
  %v1547 = vld [vmem:[%s15 + $0x14] sm:$0xf]
  %v1548 = vld [vmem:[%s15 + $0x18] sm:$0xf]
  %v1549 = vld [vmem:[%s15 + $0x1c] sm:$0xf]
  %v1550 = vld [vmem:[%s16] sm:$0x1]
  %v1552 = vperm.slane %v1550, 0
  %v1562 = vunpack.c.l.b16 %v1542
  %v1563 = vunpack.c.l.b16 %v1543
  %v1564 = vunpack.c.l.b16 %v1544
  %v1565 = vunpack.c.l.b16 %v1545
  %v1566 = vunpack.c.l.b16 %v1546
  %v1567 = vunpack.c.l.b16 %v1547
  %v1568 = vunpack.c.l.b16 %v1548
  %v1569 = vunpack.c.l.b16 %v1549
  %v1570 = vpack.c.b16 %v1563, %v1562
  %v1571 = vpack.c.b16 %v1565, %v1564
  %v1572 = vpack.c.b16 %v1567, %v1566
  %v1573 = vpack.c.b16 %v1569, %v1568
  %v1579 = vsel %vm261, %v1541, 0
  %1581 = vmatpush.bf16.msra.mxu0 0
  %1582 = vmatpush.bf16.msra.mxu0 0
  %1583 = vmatpush.bf16.msra.mxu0 0
  %1584 = vmatpush.bf16.msra.mxu0 0
  %1585 = vmatpush.bf16.msra.mxu0 %v1573
  %1586 = vmatpush.bf16.msra.mxu0 %v1572
  %1587 = vmatpush.bf16.msra.mxu0 %v1571
  %1588 = vmatpush.bf16.msra.mxu0 %v1570
  %1589 = vmatmul.bf16.gmra.mxu0 %v1579
  %v1590 = vpop.f32.mrf.mxu0
  %v1591 = vadd.f32 %v1552, %v1590
  %v1592 = vpop.f32.mrf.mxu0
  %v1593 = vadd.f32 %v1552, %v1592
  %1594 = vdwg.mxu0
  %v1597 = vrot.slane %v1591, 2
  %v1598 = vrot.slane %v1591, 4
  %v1599 = vrot.slane %v1591, 6
  %v1600 = vrot.slane %v1593, 2
  %v1601 = vrot.slane %v1593, 4
  %v1602 = vrot.slane %v1593, 6
  %1609 = vst [vmem:[%s17] sm:$0x3] %v1591
  %1610 = vst [vmem:[%s17 + $0x2] sm:$0x3] %v1597
  %1611 = vst [vmem:[%s17 + $0x4] sm:$0x3] %v1598
  %1612 = vst [vmem:[%s17 + $0x6] sm:$0x3] %v1599
  %1613 = vst [vmem:[%s17 + $0x8] sm:$0x3] %v1593
  %1614 = vst [vmem:[%s17 + $0xa] sm:$0x3] %v1600
  %1615 = vst [vmem:[%s17 + $0xc] sm:$0x3] %v1601
  %1616 = vst [vmem:[%s17 + $0xe] sm:$0x3] %v1602
  // Predicated region
  $region70: #{neural_de_forward.1} parent=0 // pred_check
    _
  $region71: #{neural_de_forward.1} parent=0 // pred_check_branch
    %1618 = sbr.rel (0) target = $region73
  $region72: #{neural_de_forward.1} parent=0 // pred_region
    _
  $region73: #{neural_de_forward.1} parent=0 // pred_fallthru
    _
  // Predicated region
  $region74: #{neural_de_forward.1} parent=0 // pred_check
    _
  $region75: #{neural_de_forward.1} parent=0 // pred_check_branch
    %1620 = sbr.rel (0) target = $region77
  $region76: #{neural_de_forward.1} parent=0 // pred_region
    _
  $region77: #{neural_de_forward.1} parent=0 // pred_fallthru
    _

</llo_original>
